<compile_context>
chip_gen: v5e
topology: v5e:2x2
jax: 0.10.0
libtpu: 0.0.40
codegen_flags: <defaults>
</compile_context>

<pallas_src>
import functools

import jax
import jax.numpy as jnp
from jax import lax
from jax.experimental import pallas as pl
from jax.experimental.pallas import tpu as pltpu


# ---------------------------------------------------------------------------
# Fused kernel: conv-as-batched-matmul + bias + ReLU, flatten, single FC matmul.
# One grid step = TB batch samples.  All weights stay VMEM-resident.
# ---------------------------------------------------------------------------
def _fused_encoder_kernel(pat_ref, wc_ref, bc_ref, wf_ref, fb_ref, o_ref):
    # pat_ref: (P, K, TB) bf16  im2col patches, pixel-major / sample on lanes
    # wc_ref : (C, K)     bf16  conv weight, OIHW-flattened
    # bc_ref : (1, C, 1)  f32   conv bias
    # wf_ref : (P*C, Lp)  bf16  FC weight, rows ordered (p, c)
    # fb_ref : (1, Lp)    f32   FC bias (zero-padded to Lp lanes)
    # o_ref  : (TB, Lp)   f32
    P, K, TB = pat_ref.shape
    C = wc_ref.shape[0]

    # Conv as a batched matmul over the P output pixels:
    #   h[p, c, b] = sum_k wc[c, k] * pat[p, k, b]
    wc_b = jnp.broadcast_to(wc_ref[...][None, :, :], (P, C, K))          # (P, C, K) bf16
    h = jnp.einsum("pck,pkb->pcb", wc_b, pat_ref[...],
                   preferred_element_type=jnp.float32)                    # (P, C, TB) f32
    h = jnp.maximum(h + bc_ref[...], 0.0)                                 # bias + ReLU (f32, VPU)

    # Flatten (p, c) into one 1024-deep contraction axis.  The lane dim (TB) is
    # untouched and C=16 is whole sublane tiles, so this reshape is layout-free.
    hflat = h.astype(jnp.bfloat16).reshape(P * C, TB)                     # (P*C, TB) bf16

    # FC: z[b, l] = sum_m hflat[m, b] * wf[m, l]  -- one MXU matmul, 1024 deep.
    z = lax.dot_general(hflat, wf_ref[...], (((0,), (0,)), ((), ())),
                        preferred_element_type=jnp.float32)               # (TB, Lp) f32
    o_ref[...] = z + fb_ref[...]                                          # lane-dense store


# ---------------------------------------------------------------------------
# One-time parameter preparation (hoisted off the hot path).
# ---------------------------------------------------------------------------
def prepare_encoder_params(params):
    conv_w, conv_b = params["conv_w"], params["conv_b"]        # (16, Cin, 3, 3), (16,)
    fc_w, fc_b = params["fc_w"], params["fc_b"]                # (L, M), (L,)
    c_out, c_in, kh, kw = conv_w.shape
    L, M = fc_w.shape
    assert M % c_out == 0, "fc_z input dim must equal c_out * OH * OW"
    P = M // c_out                                             # OH * OW
    K = c_in * kh * kw
    Lp = max(128, ((L + 127) // 128) * 128)                    # lane-dense latent width

    wc = conv_w.reshape(c_out, K).astype(jnp.bfloat16)                   # (16, K)
    bc = conv_b.reshape(1, c_out, 1).astype(jnp.float32)                 # (1, 16, 1)
    # FC weight rows reordered to (p, c) so they line up with the kernel's (P, C, TB)
    # activation flatten; columns zero-padded to Lp.  Matches torch's NCHW .view:
    # wf[p*c_out + c, l] = fc_w[l, c*P + p].
    wf = jnp.transpose(fc_w.reshape(L, c_out, P), (2, 1, 0)).reshape(P * c_out, L)
    wf = jnp.pad(wf, ((0, 0), (0, Lp - L))).astype(jnp.bfloat16)         # (P*16, Lp)
    fb = jnp.pad(fc_b, (0, Lp - L)).astype(jnp.float32).reshape(1, Lp)   # (1, Lp)
    return {"wc": wc, "bc": bc, "wf": wf, "fb": fb}


# ---------------------------------------------------------------------------
# im2col producing (P, K, B): pixel-major rows, K ordered (c_in, kh, kw) to match
# the OIHW weight flatten, batch on the minor dim so grid blocks slice it cleanly.
# TODO(synk): fold this patch extraction into the kernel for non-toy image sizes.
# ---------------------------------------------------------------------------
def _im2col_pkb(x, k=3, stride=2, pad=1):
    B, C, H, W = x.shape
    OH = (H + 2 * pad - k) // stride + 1
    OW = (W + 2 * pad - k) // stride + 1
    xp = jnp.pad(x, ((0, 0), (0, 0), (pad, pad), (pad, pad)))
    cols = []
    for dh in range(k):
        for dw in range(k):
            cols.append(xp[:, :, dh:dh + stride * OH:stride, dw:dw + stride * OW:stride])
    pat = jnp.stack(cols, axis=2)                       # (B, C, k*k, OH, OW)
    pat = pat.reshape(B, C * k * k, OH * OW)            # (B, K, P)
    pat = jnp.transpose(pat, (2, 1, 0))                 # (P, K, B)
    return pat.astype(jnp.bfloat16), OH, OW


def _batch_blocking(batch):
    # TB samples per grid step.  When the batch is split, TB must be a multiple of
    # 128 (BlockSpec lane-dim rule), so small batches run in a single step and
    # large batches use 128-sample steps (>= 2 steps keeps both v7x TCs busy).
    if batch <= 256:
        return batch, batch
    tb = 128
    bp = ((batch + tb - 1) // tb) * tb
    return tb, bp


# ---------------------------------------------------------------------------
# Forward pass
# ---------------------------------------------------------------------------
@functools.partial(jax.jit, static_argnames=("latent_size",))
def ae_encoder_forward(x, prepared, *, latent_size):
    wc, bc, wf, fb = prepared["wc"], prepared["bc"], prepared["wf"], prepared["fb"]
    c_out, K = wc.shape
    Lp = wf.shape[1]

    pat, _, _ = _im2col_pkb(x)                          # (P, K, B) bf16
    P, _, B = pat.shape
    if wf.shape[0] != P * c_out:
        raise ValueError(
            f"fc_z was built for {wf.shape[0] // c_out} conv output pixels but the "
            f"input produces {P}; input H/W is inconsistent with the Linear layer.")

    TB, Bp = _batch_blocking(B)
    if Bp != B:
        pat = jnp.pad(pat, ((0, 0), (0, 0), (0, Bp - B)))

    flops = int(Bp * (2 * c_out * K * P + 2 * c_out * P * Lp))
    bytes_accessed = int(pat.size * 2 + wc.size * 2 + bc.size * 4
                         + wf.size * 2 + fb.size * 4 + Bp * Lp * 4)

    out = pl.pallas_call(
        _fused_encoder_kernel,
        out_shape=jax.ShapeDtypeStruct((Bp, Lp), jnp.float32),
        grid=(Bp // TB,),
        in_specs=[
            pl.BlockSpec((P, K, TB), lambda b: (0, 0, b)),        # patches: per batch block
            pl.BlockSpec((c_out, K), lambda b: (0, 0)),           # conv weight (resident)
            pl.BlockSpec((1, c_out, 1), lambda b: (0, 0, 0)),     # conv bias   (resident)
            pl.BlockSpec((P * c_out, Lp), lambda b: (0, 0)),      # FC weight   (resident)
            pl.BlockSpec((1, Lp), lambda b: (0, 0)),              # FC bias     (resident)
        ],
        out_specs=pl.BlockSpec((TB, Lp), lambda b: (b, 0)),
        compiler_params=pltpu.CompilerParams(
            dimension_semantics=("parallel",),
            vmem_limit_bytes=32 * 1024 * 1024,
        ),
        cost_estimate=pl.CostEstimate(flops=flops, transcendentals=0,
                                      bytes_accessed=bytes_accessed),
    )(pat, wc, bc, wf, fb)

    return out[:B, :latent_size]


# ---------------------------------------------------------------------------
# Pure-JAX reference (mirrors the PyTorch forward exactly) for validation
# ---------------------------------------------------------------------------
def ae_encoder_reference(x, params):
    conv_w, conv_b, fc_w, fc_b = (
        params["conv_w"], params["conv_b"], params["fc_w"], params["fc_b"]
    )
    y = lax.conv_general_dilated(
        x, conv_w, window_strides=(2, 2), padding=((1, 1), (1, 1)),
        dimension_numbers=("NCHW", "OIHW", "NCHW"),
    ) + conv_b.reshape(1, -1, 1, 1)
    y = jnp.maximum(y, 0.0)
    flat = y.reshape(y.shape[0], -1)                    # NCHW flatten, like torch .view
    return flat @ fc_w.T + fc_b


# ---------------------------------------------------------------------------
if __name__ == "__main__":
    # Small shapes consistent with the module: batch=2, img_channels=4, 16x16 input.
    B, C, H, W = 2, 4, 16, 16
    OH = OW = (H + 2 - 3) // 2 + 1                      # = 8
    m = 16 * OH * OW                                    # = 1024
    latent_size = 32

    key = jax.random.PRNGKey(0)
    k1, k2, k3, k4, kx = jax.random.split(key, 5)
    params = {
        "conv_w": jax.random.normal(k1, (16, C, 3, 3), jnp.float32) * 0.1,
        "conv_b": jax.random.normal(k2, (16,), jnp.float32) * 0.1,
        "fc_w": jax.random.normal(k3, (latent_size, m), jnp.float32) * 0.02,
        "fc_b": jax.random.normal(k4, (latent_size,), jnp.float32) * 0.02,
    }
    x = jax.random.normal(kx, (B, C, H, W), jnp.float32)

    prepared = prepare_encoder_params(params)           # one-time weight repacking

    z = jax.block_until_ready(ae_encoder_forward(x, prepared, latent_size=latent_size))
    z_ref = jax.block_until_ready(ae_encoder_reference(x, params))

    assert z.shape == (B, latent_size), z.shape
    # bf16 MXU inputs with f32 accumulation => slightly looser tolerance vs f32 reference.
    err = float(jnp.max(jnp.abs(z - z_ref)))
    assert jnp.allclose(z, z_ref, atol=3e-2, rtol=3e-2), err
    print("KERNEL_OK")
</pallas_src>

<mosaic_0001>
module attributes {stable_mosaic.version = 11 : i64} {
  func.func @_fused_encoder_kernel(%arg0: i32, %arg1: memref<64x36x2xbf16, #tpu.memory_space<vmem>>, %arg2: memref<16x36xbf16, #tpu.memory_space<vmem>>, %arg3: memref<1x16x1xf32, #tpu.memory_space<vmem>>, %arg4: memref<1024x128xbf16, #tpu.memory_space<vmem>>, %arg5: memref<1x128xf32, #tpu.memory_space<vmem>>, %arg6: memref<2x128xf32, #tpu.memory_space<vmem>>) attributes {dimension_semantics = [#tpu.dimension_semantics<parallel>], iteration_bounds = array<i64: 1>, scalar_prefetch = 0 : i64, scratch_operands = 0 : i64, tpu.core_type = #tpu.core_type<tc>, window_params = [{transform_indices = @transform_0, window_bounds = array<i64: 64, 36, 2>}, {pipeline_mode = #tpu.pipeline_mode<synchronous>, transform_indices = @transform_1, window_bounds = array<i64: 16, 36>}, {pipeline_mode = #tpu.pipeline_mode<synchronous>, transform_indices = @transform_2, window_bounds = array<i64: 1, 16, 1>}, {pipeline_mode = #tpu.pipeline_mode<synchronous>, transform_indices = @transform_3, window_bounds = array<i64: 1024, 128>}, {pipeline_mode = #tpu.pipeline_mode<synchronous>, transform_indices = @transform_4, window_bounds = array<i64: 1, 128>}, {transform_indices = @transform_5, window_bounds = array<i64: 2, 128>}]} {
    %c0 = arith.constant 0 : index
    %c0_0 = arith.constant 0 : index
    %0 = vector.load %arg2[%c0, %c0_0] : memref<16x36xbf16, #tpu.memory_space<vmem>>, vector<16x36xbf16>
    %1 = vector.shape_cast %0 : vector<16x36xbf16> to vector<1x16x36xbf16>
    %2 = vector.shape_cast %1 : vector<1x16x36xbf16> to vector<1x16x36xbf16>
    %3 = vector.broadcast %2 : vector<1x16x36xbf16> to vector<64x16x36xbf16>
    %c0_1 = arith.constant 0 : index
    %c0_2 = arith.constant 0 : index
    %c0_3 = arith.constant 0 : index
    %4 = vector.load %arg1[%c0_1, %c0_2, %c0_3] : memref<64x36x2xbf16, #tpu.memory_space<vmem>>, vector<64x36x2xbf16>
    "tpu.trace_start"() <{level = 10 : i32, message = "pck,pkb->pcb"}> : () -> ()
    %cst = arith.constant dense<0.000000e+00> : vector<64x16x2xf32>
    %5 = tpu.matmul %3, %4, %cst {dimension_numbers = #tpu.dot_dimension_numbers<[2], [1], [1], [2], [0, 0, 0, 1, 1, 2], [0], [0]>} : vector<64x16x36xbf16>, vector<64x36x2xbf16>, vector<64x16x2xf32> -> vector<64x16x2xf32>
    "tpu.trace_stop"() : () -> ()
    %c0_4 = arith.constant 0 : index
    %c0_5 = arith.constant 0 : index
    %c0_6 = arith.constant 0 : index
    %6 = vector.load %arg3[%c0_4, %c0_5, %c0_6] : memref<1x16x1xf32, #tpu.memory_space<vmem>>, vector<1x16x1xf32>
    %7 = vector.broadcast %6 : vector<1x16x1xf32> to vector<64x16x2xf32>
    %8 = arith.addf %5, %7 : vector<64x16x2xf32>
    %cst_7 = arith.constant 0.000000e+00 : f32
    %9 = vector.broadcast %cst_7 : f32 to vector<64x16x2xf32>
    %10 = arith.maximumf %8, %9 : vector<64x16x2xf32>
    %11 = arith.truncf %10 : vector<64x16x2xf32> to vector<64x16x2xbf16>
    %12 = vector.shape_cast %11 : vector<64x16x2xbf16> to vector<1024x2xbf16>
    %c0_8 = arith.constant 0 : index
    %c0_9 = arith.constant 0 : index
    %13 = vector.load %arg4[%c0_8, %c0_9] : memref<1024x128xbf16, #tpu.memory_space<vmem>>, vector<1024x128xbf16>
    %cst_10 = arith.constant dense<0.000000e+00> : vector<2x128xf32>
    %14 = tpu.matmul %12, %13, %cst_10 {dimension_numbers = #tpu.dot_dimension_numbers<[0], [0], [1], [1], [0, 1, 1, 1], [], []>} : vector<1024x2xbf16>, vector<1024x128xbf16>, vector<2x128xf32> -> vector<2x128xf32>
    %c0_11 = arith.constant 0 : index
    %c0_12 = arith.constant 0 : index
    %15 = vector.load %arg5[%c0_11, %c0_12] : memref<1x128xf32, #tpu.memory_space<vmem>>, vector<1x128xf32>
    %16 = vector.broadcast %15 : vector<1x128xf32> to vector<2x128xf32>
    %17 = arith.addf %14, %16 : vector<2x128xf32>
    %c0_13 = arith.constant 0 : index
    %c0_14 = arith.constant 0 : index
    %18 = vector.load %arg6[%c0_13, %c0_14] : memref<2x128xf32, #tpu.memory_space<vmem>>, vector<2x128xf32>
    tpu.vector_store %arg6[%c0_13, %c0_14], %17 {strides = array<i32>} : memref<2x128xf32, #tpu.memory_space<vmem>>, vector<2x128xf32>,
    return
  }
  func.func @transform_0(%arg0: i32) -> (i32, i32, i32) {
    %c0_i32 = arith.constant 0 : i32
    %c0_i32_0 = arith.constant 0 : i32
    %c0_i32_1 = arith.constant 0 : i32
    return %c0_i32, %c0_i32_0, %arg0 : i32, i32, i32
  }
  func.func @transform_1(%arg0: i32) -> (i32, i32) {
    %c0_i32 = arith.constant 0 : i32
    %c0_i32_0 = arith.constant 0 : i32
    %c0_i32_1 = arith.constant 0 : i32
    return %c0_i32, %c0_i32_0 : i32, i32
  }
  func.func @transform_2(%arg0: i32) -> (i32, i32, i32) {
    %c0_i32 = arith.constant 0 : i32
    %c0_i32_0 = arith.constant 0 : i32
    %c0_i32_1 = arith.constant 0 : i32
    %c0_i32_2 = arith.constant 0 : i32
    return %c0_i32, %c0_i32_0, %c0_i32_1 : i32, i32, i32
  }
  func.func @transform_3(%arg0: i32) -> (i32, i32) {
    %c0_i32 = arith.constant 0 : i32
    %c0_i32_0 = arith.constant 0 : i32
    %c0_i32_1 = arith.constant 0 : i32
    return %c0_i32, %c0_i32_0 : i32, i32
  }
  func.func @transform_4(%arg0: i32) -> (i32, i32) {
    %c0_i32 = arith.constant 0 : i32
    %c0_i32_0 = arith.constant 0 : i32
    %c0_i32_1 = arith.constant 0 : i32
    return %c0_i32, %c0_i32_0 : i32, i32
  }
  func.func @transform_5(%arg0: i32) -> (i32, i32) {
    %c0_i32 = arith.constant 0 : i32
    %c0_i32_0 = arith.constant 0 : i32
    return %arg0, %c0_i32 : i32, i32
  }
}

</mosaic_0001>

<llo_original>
// kernel: ae_encoder_forward.1
$region0: #{ae_encoder_forward.1}
  #allocation0 [shape = 'u32[]', space=smem, size = 0x4, offset = 0x4, fixed_abs, tag = 'smem constant byte address 0x4 - core index']
  #allocation1 [shape = 'u32[72,128]{1,0:T(1,128)}', space=vmem, size = 0x9000, scoped, tag = 'internal scratch']
  %s0 = inlined_call_operand.vmem [shape: bf16[64,36,2], index: 0, kind: input, shape index: {}]
  %s1 = inlined_call_operand.vmem [shape: bf16[16,36], index: 1, kind: input, shape index: {}]
  %s2 = inlined_call_operand.vmem [shape: f32[1,16,1], index: 2, kind: input, shape index: {}]
  %s3 = inlined_call_operand.vmem [shape: bf16[1024,128], index: 3, kind: input, shape index: {}]
  %s4 = inlined_call_operand.vmem [shape: f32[1,128], index: 4, kind: input, shape index: {}]
  %s5 = inlined_call_operand.hbm [shape: f32[2,128], index: 5, kind: output, shape index: {}]
  %s6 = sld [smem:[#allocation0]]
  $region30: #{ae_encoder_forward.1} parent=0
    _
  %s8 = ssub.s32 1, %s6
  %s9 = scalar_select 0, %s8, %s6
  $region1: #{ae_encoder_forward.1} parent=0
    #allocation2 [shape = 'u8[1024]{0}', space=vmem, size = 0x400, scoped, tag = 'output window, operand 0, single buffered']
    #allocation3 [shape = 's32[1]{0}', space=sflag, size = 0x4, scoped, tag = 'scoped memory for ae_encoder_forward.1']
    %10 = vsyncpa [#allocation3], 0
    // Predicated region
    $region2: #{ae_encoder_forward.1} parent=1 // pred_check
      _
    $region3: #{ae_encoder_forward.1} parent=1 // pred_check_branch
      %12 = sbr.rel (0) target = $region5
    $region4: #{ae_encoder_forward.1} parent=1 // pred_region
      _
    $region5: #{ae_encoder_forward.1} parent=1 // pred_fallthru
      _
    // Predicated region
    $region6: #{ae_encoder_forward.1} parent=1 // pred_check
      _
    $region7: #{ae_encoder_forward.1} parent=1 // pred_check_branch
      %14 = sbr.rel (0) target = $region9
    $region8: #{ae_encoder_forward.1} parent=1 // pred_region
      _
    $region9: #{ae_encoder_forward.1} parent=1 // pred_fallthru
      _
    // Predicated region
    $region10: #{ae_encoder_forward.1} parent=1 // pred_check
      _
    $region11: #{ae_encoder_forward.1} parent=1 // pred_check_branch
      %16 = sbr.rel (0) target = $region13
    $region12: #{ae_encoder_forward.1} parent=1 // pred_region
      _
    $region13: #{ae_encoder_forward.1} parent=1 // pred_fallthru
      _
    // Predicated region
    $region14: #{ae_encoder_forward.1} parent=1 // pred_check
      _
    $region15: #{ae_encoder_forward.1} parent=1 // pred_check_branch
      %18 = sbr.rel (0) target = $region17
    $region16: #{ae_encoder_forward.1} parent=1 // pred_region
      _
    $region17: #{ae_encoder_forward.1} parent=1 // pred_fallthru
      _
    // Predicated region
    $region18: #{ae_encoder_forward.1} parent=1 // pred_check
      _
    $region19: #{ae_encoder_forward.1} parent=1 // pred_check_branch
      %20 = sbr.rel (0) target = $region21
    $region20: #{ae_encoder_forward.1} parent=1 // pred_region
      _
    $region21: #{ae_encoder_forward.1} parent=1 // pred_fallthru
      _
    %v22 = vld [vmem:[%s1] sm:$0xf]
    %v23 = vld [vmem:[%s1 + $0x4] sm:$0xf]
    %v24 = vld [vmem:[%s0] sm:$0xf]
    %v25 = vld [vmem:[%s0 + $0x4] sm:$0xf]
    %v26 = vld [vmem:[%s0 + $0x8] sm:$0xf]
    %v27 = vld [vmem:[%s0 + $0xc] sm:$0xf]
    %v28 = vld [vmem:[%s0 + $0x10] sm:$0x3]
    %v29 = vld [vmem:[%s0 + $0x14] sm:$0xf]
    %v30 = vld [vmem:[%s0 + $0x18] sm:$0xf]
    %v31 = vld [vmem:[%s0 + $0x1c] sm:$0xf]
    %v32 = vld [vmem:[%s0 + $0x20] sm:$0xf]
    %v33 = vld [vmem:[%s0 + $0x24] sm:$0x3]
    %v34 = vld [vmem:[%s0 + $0x28] sm:$0xf]
    %v35 = vld [vmem:[%s0 + $0x2c] sm:$0xf]
    %v36 = vld [vmem:[%s0 + $0x30] sm:$0xf]
    %v37 = vld [vmem:[%s0 + $0x34] sm:$0xf]
    %v38 = vld [vmem:[%s0 + $0x38] sm:$0x3]
    %v39 = vld [vmem:[%s0 + $0x3c] sm:$0xf]
    %v40 = vld [vmem:[%s0 + $0x40] sm:$0xf]
    %v41 = vld [vmem:[%s0 + $0x44] sm:$0xf]
    %v42 = vld [vmem:[%s0 + $0x48] sm:$0xf]
    %v43 = vld [vmem:[%s0 + $0x4c] sm:$0x3]
    %v44 = vld [vmem:[%s0 + $0x50] sm:$0xf]
    %v45 = vld [vmem:[%s0 + $0x54] sm:$0xf]
    %v46 = vld [vmem:[%s0 + $0x58] sm:$0xf]
    %v47 = vld [vmem:[%s0 + $0x5c] sm:$0xf]
    %v48 = vld [vmem:[%s0 + $0x60] sm:$0x3]
    %v49 = vld [vmem:[%s0 + $0x64] sm:$0xf]
    %v50 = vld [vmem:[%s0 + $0x68] sm:$0xf]
    %v51 = vld [vmem:[%s0 + $0x6c] sm:$0xf]
    %v52 = vld [vmem:[%s0 + $0x70] sm:$0xf]
    %v53 = vld [vmem:[%s0 + $0x74] sm:$0x3]
    %v54 = vld [vmem:[%s0 + $0x78] sm:$0xf]
    %v55 = vld [vmem:[%s0 + $0x7c] sm:$0xf]
    %v56 = vld [vmem:[%s0 + $0x80] sm:$0xf]
    %v57 = vld [vmem:[%s0 + $0x84] sm:$0xf]
    %v58 = vld [vmem:[%s0 + $0x88] sm:$0x3]
    %v59 = vld [vmem:[%s0 + $0x8c] sm:$0xf]
    %v60 = vld [vmem:[%s0 + $0x90] sm:$0xf]
    %v61 = vld [vmem:[%s0 + $0x94] sm:$0xf]
    %v62 = vld [vmem:[%s0 + $0x98] sm:$0xf]
    %v63 = vld [vmem:[%s0 + $0x9c] sm:$0x3]
    %v64 = vld [vmem:[%s0 + $0xa0] sm:$0xf]
    %v65 = vld [vmem:[%s0 + $0xa4] sm:$0xf]
    %v66 = vld [vmem:[%s0 + $0xa8] sm:$0xf]
    %v67 = vld [vmem:[%s0 + $0xac] sm:$0xf]
    %v68 = vld [vmem:[%s0 + $0xb0] sm:$0x3]
    %v69 = vld [vmem:[%s0 + $0xb4] sm:$0xf]
    %v70 = vld [vmem:[%s0 + $0xb8] sm:$0xf]
    %v71 = vld [vmem:[%s0 + $0xbc] sm:$0xf]
    %v72 = vld [vmem:[%s0 + $0xc0] sm:$0xf]
    %v73 = vld [vmem:[%s0 + $0xc4] sm:$0x3]
    %v74 = vld [vmem:[%s0 + $0xc8] sm:$0xf]
    %v75 = vld [vmem:[%s0 + $0xcc] sm:$0xf]
    %v76 = vld [vmem:[%s0 + $0xd0] sm:$0xf]
    %v77 = vld [vmem:[%s0 + $0xd4] sm:$0xf]
    %v78 = vld [vmem:[%s0 + $0xd8] sm:$0x3]
    %v79 = vld [vmem:[%s0 + $0xdc] sm:$0xf]
    %v80 = vld [vmem:[%s0 + $0xe0] sm:$0xf]
    %v81 = vld [vmem:[%s0 + $0xe4] sm:$0xf]
    %v82 = vld [vmem:[%s0 + $0xe8] sm:$0xf]
    %v83 = vld [vmem:[%s0 + $0xec] sm:$0x3]
    %v84 = vld [vmem:[%s0 + $0xf0] sm:$0xf]
    %v85 = vld [vmem:[%s0 + $0xf4] sm:$0xf]
    %v86 = vld [vmem:[%s0 + $0xf8] sm:$0xf]
    %v87 = vld [vmem:[%s0 + $0xfc] sm:$0xf]
    %v88 = vld [vmem:[%s0 + $0x100] sm:$0x3]
    %v89 = vld [vmem:[%s0 + $0x104] sm:$0xf]
    %v90 = vld [vmem:[%s0 + $0x108] sm:$0xf]
    %v91 = vld [vmem:[%s0 + $0x10c] sm:$0xf]
    %v92 = vld [vmem:[%s0 + $0x110] sm:$0xf]
    %v93 = vld [vmem:[%s0 + $0x114] sm:$0x3]
    %v94 = vld [vmem:[%s0 + $0x118] sm:$0xf]
    %v95 = vld [vmem:[%s0 + $0x11c] sm:$0xf]
    %v96 = vld [vmem:[%s0 + $0x120] sm:$0xf]
    %v97 = vld [vmem:[%s0 + $0x124] sm:$0xf]
    %v98 = vld [vmem:[%s0 + $0x128] sm:$0x3]
    %v99 = vld [vmem:[%s0 + $0x12c] sm:$0xf]
    %v100 = vld [vmem:[%s0 + $0x130] sm:$0xf]
    %v101 = vld [vmem:[%s0 + $0x134] sm:$0xf]
    %v102 = vld [vmem:[%s0 + $0x138] sm:$0xf]
    %v103 = vld [vmem:[%s0 + $0x13c] sm:$0x3]
    %v104 = vld [vmem:[%s0 + $0x140] sm:$0xf]
    %v105 = vld [vmem:[%s0 + $0x144] sm:$0xf]
    %v106 = vld [vmem:[%s0 + $0x148] sm:$0xf]
    %v107 = vld [vmem:[%s0 + $0x14c] sm:$0xf]
    %v108 = vld [vmem:[%s0 + $0x150] sm:$0x3]
    %v109 = vld [vmem:[%s0 + $0x154] sm:$0xf]
    %v110 = vld [vmem:[%s0 + $0x158] sm:$0xf]
    %v111 = vld [vmem:[%s0 + $0x15c] sm:$0xf]
    %v112 = vld [vmem:[%s0 + $0x160] sm:$0xf]
    %v113 = vld [vmem:[%s0 + $0x164] sm:$0x3]
    %v114 = vld [vmem:[%s0 + $0x168] sm:$0xf]
    %v115 = vld [vmem:[%s0 + $0x16c] sm:$0xf]
    %v116 = vld [vmem:[%s0 + $0x170] sm:$0xf]
    %v117 = vld [vmem:[%s0 + $0x174] sm:$0xf]
    %v118 = vld [vmem:[%s0 + $0x178] sm:$0x3]
    %v119 = vld [vmem:[%s0 + $0x17c] sm:$0xf]
    %v120 = vld [vmem:[%s0 + $0x180] sm:$0xf]
    %v121 = vld [vmem:[%s0 + $0x184] sm:$0xf]
    %v122 = vld [vmem:[%s0 + $0x188] sm:$0xf]
    %v123 = vld [vmem:[%s0 + $0x18c] sm:$0x3]
    %v124 = vld [vmem:[%s0 + $0x190] sm:$0xf]
    %v125 = vld [vmem:[%s0 + $0x194] sm:$0xf]
    %v126 = vld [vmem:[%s0 + $0x198] sm:$0xf]
    %v127 = vld [vmem:[%s0 + $0x19c] sm:$0xf]
    %v128 = vld [vmem:[%s0 + $0x1a0] sm:$0x3]
    %v129 = vld [vmem:[%s0 + $0x1a4] sm:$0xf]
    %v130 = vld [vmem:[%s0 + $0x1a8] sm:$0xf]
    %v131 = vld [vmem:[%s0 + $0x1ac] sm:$0xf]
    %v132 = vld [vmem:[%s0 + $0x1b0] sm:$0xf]
    %v133 = vld [vmem:[%s0 + $0x1b4] sm:$0x3]
    %v134 = vld [vmem:[%s0 + $0x1b8] sm:$0xf]
    %v135 = vld [vmem:[%s0 + $0x1bc] sm:$0xf]
    %v136 = vld [vmem:[%s0 + $0x1c0] sm:$0xf]
    %v137 = vld [vmem:[%s0 + $0x1c4] sm:$0xf]
    %v138 = vld [vmem:[%s0 + $0x1c8] sm:$0x3]
    %v139 = vld [vmem:[%s0 + $0x1cc] sm:$0xf]
    %v140 = vld [vmem:[%s0 + $0x1d0] sm:$0xf]
    %v141 = vld [vmem:[%s0 + $0x1d4] sm:$0xf]
    %v142 = vld [vmem:[%s0 + $0x1d8] sm:$0xf]
    %v143 = vld [vmem:[%s0 + $0x1dc] sm:$0x3]
    %v144 = vld [vmem:[%s0 + $0x1e0] sm:$0xf]
    %v145 = vld [vmem:[%s0 + $0x1e4] sm:$0xf]
    %v146 = vld [vmem:[%s0 + $0x1e8] sm:$0xf]
    %v147 = vld [vmem:[%s0 + $0x1ec] sm:$0xf]
    %v148 = vld [vmem:[%s0 + $0x1f0] sm:$0x3]
    %v149 = vld [vmem:[%s0 + $0x1f4] sm:$0xf]
    %v150 = vld [vmem:[%s0 + $0x1f8] sm:$0xf]
    %v151 = vld [vmem:[%s0 + $0x1fc] sm:$0xf]
    %v152 = vld [vmem:[%s0 + $0x200] sm:$0xf]
    %v153 = vld [vmem:[%s0 + $0x204] sm:$0x3]
    %v154 = vld [vmem:[%s0 + $0x208] sm:$0xf]
    %v155 = vld [vmem:[%s0 + $0x20c] sm:$0xf]
    %v156 = vld [vmem:[%s0 + $0x210] sm:$0xf]
    %v157 = vld [vmem:[%s0 + $0x214] sm:$0xf]
    %v158 = vld [vmem:[%s0 + $0x218] sm:$0x3]
    %v159 = vld [vmem:[%s0 + $0x21c] sm:$0xf]
    %v160 = vld [vmem:[%s0 + $0x220] sm:$0xf]
    %v161 = vld [vmem:[%s0 + $0x224] sm:$0xf]
    %v162 = vld [vmem:[%s0 + $0x228] sm:$0xf]
    %v163 = vld [vmem:[%s0 + $0x22c] sm:$0x3]
    %v164 = vld [vmem:[%s0 + $0x230] sm:$0xf]
    %v165 = vld [vmem:[%s0 + $0x234] sm:$0xf]
    %v166 = vld [vmem:[%s0 + $0x238] sm:$0xf]
    %v167 = vld [vmem:[%s0 + $0x23c] sm:$0xf]
    %v168 = vld [vmem:[%s0 + $0x240] sm:$0x3]
    %v169 = vld [vmem:[%s0 + $0x244] sm:$0xf]
    %v170 = vld [vmem:[%s0 + $0x248] sm:$0xf]
    %v171 = vld [vmem:[%s0 + $0x24c] sm:$0xf]
    %v172 = vld [vmem:[%s0 + $0x250] sm:$0xf]
    %v173 = vld [vmem:[%s0 + $0x254] sm:$0x3]
    %v174 = vld [vmem:[%s0 + $0x258] sm:$0xf]
    %v175 = vld [vmem:[%s0 + $0x25c] sm:$0xf]
    %v176 = vld [vmem:[%s0 + $0x260] sm:$0xf]
    %v177 = vld [vmem:[%s0 + $0x264] sm:$0xf]
    %v178 = vld [vmem:[%s0 + $0x268] sm:$0x3]
    %v179 = vld [vmem:[%s0 + $0x26c] sm:$0xf]
    %v180 = vld [vmem:[%s0 + $0x270] sm:$0xf]
    %v181 = vld [vmem:[%s0 + $0x274] sm:$0xf]
    %v182 = vld [vmem:[%s0 + $0x278] sm:$0xf]
    %v183 = vld [vmem:[%s0 + $0x27c] sm:$0x3]
    %v184 = vld [vmem:[%s0 + $0x280] sm:$0xf]
    %v185 = vld [vmem:[%s0 + $0x284] sm:$0xf]
    %v186 = vld [vmem:[%s0 + $0x288] sm:$0xf]
    %v187 = vld [vmem:[%s0 + $0x28c] sm:$0xf]
    %v188 = vld [vmem:[%s0 + $0x290] sm:$0x3]
    %v189 = vld [vmem:[%s0 + $0x294] sm:$0xf]
    %v190 = vld [vmem:[%s0 + $0x298] sm:$0xf]
    %v191 = vld [vmem:[%s0 + $0x29c] sm:$0xf]
    %v192 = vld [vmem:[%s0 + $0x2a0] sm:$0xf]
    %v193 = vld [vmem:[%s0 + $0x2a4] sm:$0x3]
    %v194 = vld [vmem:[%s0 + $0x2a8] sm:$0xf]
    %v195 = vld [vmem:[%s0 + $0x2ac] sm:$0xf]
    %v196 = vld [vmem:[%s0 + $0x2b0] sm:$0xf]
    %v197 = vld [vmem:[%s0 + $0x2b4] sm:$0xf]
    %v198 = vld [vmem:[%s0 + $0x2b8] sm:$0x3]
    %v199 = vld [vmem:[%s0 + $0x2bc] sm:$0xf]
    %v200 = vld [vmem:[%s0 + $0x2c0] sm:$0xf]
    %v201 = vld [vmem:[%s0 + $0x2c4] sm:$0xf]
    %v202 = vld [vmem:[%s0 + $0x2c8] sm:$0xf]
    %v203 = vld [vmem:[%s0 + $0x2cc] sm:$0x3]
    %v204 = vld [vmem:[%s0 + $0x2d0] sm:$0xf]
    %v205 = vld [vmem:[%s0 + $0x2d4] sm:$0xf]
    %v206 = vld [vmem:[%s0 + $0x2d8] sm:$0xf]
    %v207 = vld [vmem:[%s0 + $0x2dc] sm:$0xf]
    %v208 = vld [vmem:[%s0 + $0x2e0] sm:$0x3]
    %v209 = vld [vmem:[%s0 + $0x2e4] sm:$0xf]
    %v210 = vld [vmem:[%s0 + $0x2e8] sm:$0xf]
    %v211 = vld [vmem:[%s0 + $0x2ec] sm:$0xf]
    %v212 = vld [vmem:[%s0 + $0x2f0] sm:$0xf]
    %v213 = vld [vmem:[%s0 + $0x2f4] sm:$0x3]
    %v214 = vld [vmem:[%s0 + $0x2f8] sm:$0xf]
    %v215 = vld [vmem:[%s0 + $0x2fc] sm:$0xf]
    %v216 = vld [vmem:[%s0 + $0x300] sm:$0xf]
    %v217 = vld [vmem:[%s0 + $0x304] sm:$0xf]
    %v218 = vld [vmem:[%s0 + $0x308] sm:$0x3]
    %v219 = vld [vmem:[%s0 + $0x30c] sm:$0xf]
    %v220 = vld [vmem:[%s0 + $0x310] sm:$0xf]
    %v221 = vld [vmem:[%s0 + $0x314] sm:$0xf]
    %v222 = vld [vmem:[%s0 + $0x318] sm:$0xf]
    %v223 = vld [vmem:[%s0 + $0x31c] sm:$0x3]
    %v224 = vld [vmem:[%s0 + $0x320] sm:$0xf]
    %v225 = vld [vmem:[%s0 + $0x324] sm:$0xf]
    %v226 = vld [vmem:[%s0 + $0x328] sm:$0xf]
    %v227 = vld [vmem:[%s0 + $0x32c] sm:$0xf]
    %v228 = vld [vmem:[%s0 + $0x330] sm:$0x3]
    %v229 = vld [vmem:[%s0 + $0x334] sm:$0xf]
    %v230 = vld [vmem:[%s0 + $0x338] sm:$0xf]
    %v231 = vld [vmem:[%s0 + $0x33c] sm:$0xf]
    %v232 = vld [vmem:[%s0 + $0x340] sm:$0xf]
    %v233 = vld [vmem:[%s0 + $0x344] sm:$0x3]
    %v234 = vld [vmem:[%s0 + $0x348] sm:$0xf]
    %v235 = vld [vmem:[%s0 + $0x34c] sm:$0xf]
    %v236 = vld [vmem:[%s0 + $0x350] sm:$0xf]
    %v237 = vld [vmem:[%s0 + $0x354] sm:$0xf]
    %v238 = vld [vmem:[%s0 + $0x358] sm:$0x3]
    %v239 = vld [vmem:[%s0 + $0x35c] sm:$0xf]
    %v240 = vld [vmem:[%s0 + $0x360] sm:$0xf]
    %v241 = vld [vmem:[%s0 + $0x364] sm:$0xf]
    %v242 = vld [vmem:[%s0 + $0x368] sm:$0xf]
    %v243 = vld [vmem:[%s0 + $0x36c] sm:$0x3]
    %v244 = vld [vmem:[%s0 + $0x370] sm:$0xf]
    %v245 = vld [vmem:[%s0 + $0x374] sm:$0xf]
    %v246 = vld [vmem:[%s0 + $0x378] sm:$0xf]
    %v247 = vld [vmem:[%s0 + $0x37c] sm:$0xf]
    %v248 = vld [vmem:[%s0 + $0x380] sm:$0x3]
    %v249 = vld [vmem:[%s0 + $0x384] sm:$0xf]
    %v250 = vld [vmem:[%s0 + $0x388] sm:$0xf]
    %v251 = vld [vmem:[%s0 + $0x38c] sm:$0xf]
    %v252 = vld [vmem:[%s0 + $0x390] sm:$0xf]
    %v253 = vld [vmem:[%s0 + $0x394] sm:$0x3]
    %v254 = vld [vmem:[%s0 + $0x398] sm:$0xf]
    %v255 = vld [vmem:[%s0 + $0x39c] sm:$0xf]
    %v256 = vld [vmem:[%s0 + $0x3a0] sm:$0xf]
    %v257 = vld [vmem:[%s0 + $0x3a4] sm:$0xf]
    %v258 = vld [vmem:[%s0 + $0x3a8] sm:$0x3]
    %v259 = vld [vmem:[%s0 + $0x3ac] sm:$0xf]
    %v260 = vld [vmem:[%s0 + $0x3b0] sm:$0xf]
    %v261 = vld [vmem:[%s0 + $0x3b4] sm:$0xf]
    %v262 = vld [vmem:[%s0 + $0x3b8] sm:$0xf]
    %v263 = vld [vmem:[%s0 + $0x3bc] sm:$0x3]
    %v264 = vld [vmem:[%s0 + $0x3c0] sm:$0xf]
    %v265 = vld [vmem:[%s0 + $0x3c4] sm:$0xf]
    %v266 = vld [vmem:[%s0 + $0x3c8] sm:$0xf]
    %v267 = vld [vmem:[%s0 + $0x3cc] sm:$0xf]
    %v268 = vld [vmem:[%s0 + $0x3d0] sm:$0x3]
    %v269 = vld [vmem:[%s0 + $0x3d4] sm:$0xf]
    %v270 = vld [vmem:[%s0 + $0x3d8] sm:$0xf]
    %v271 = vld [vmem:[%s0 + $0x3dc] sm:$0xf]
    %v272 = vld [vmem:[%s0 + $0x3e0] sm:$0xf]
    %v273 = vld [vmem:[%s0 + $0x3e4] sm:$0x3]
    %v274 = vld [vmem:[%s0 + $0x3e8] sm:$0xf]
    %v275 = vld [vmem:[%s0 + $0x3ec] sm:$0xf]
    %v276 = vld [vmem:[%s0 + $0x3f0] sm:$0xf]
    %v277 = vld [vmem:[%s0 + $0x3f4] sm:$0xf]
    %v278 = vld [vmem:[%s0 + $0x3f8] sm:$0x3]
    %v279 = vld [vmem:[%s0 + $0x3fc] sm:$0xf]
    %v280 = vld [vmem:[%s0 + $0x400] sm:$0xf]
    %v281 = vld [vmem:[%s0 + $0x404] sm:$0xf]
    %v282 = vld [vmem:[%s0 + $0x408] sm:$0xf]
    %v283 = vld [vmem:[%s0 + $0x40c] sm:$0x3]
    %v284 = vld [vmem:[%s0 + $0x410] sm:$0xf]
    %v285 = vld [vmem:[%s0 + $0x414] sm:$0xf]
    %v286 = vld [vmem:[%s0 + $0x418] sm:$0xf]
    %v287 = vld [vmem:[%s0 + $0x41c] sm:$0xf]
    %v288 = vld [vmem:[%s0 + $0x420] sm:$0x3]
    %v289 = vld [vmem:[%s0 + $0x424] sm:$0xf]
    %v290 = vld [vmem:[%s0 + $0x428] sm:$0xf]
    %v291 = vld [vmem:[%s0 + $0x42c] sm:$0xf]
    %v292 = vld [vmem:[%s0 + $0x430] sm:$0xf]
    %v293 = vld [vmem:[%s0 + $0x434] sm:$0x3]
    %v294 = vld [vmem:[%s0 + $0x438] sm:$0xf]
    %v295 = vld [vmem:[%s0 + $0x43c] sm:$0xf]
    %v296 = vld [vmem:[%s0 + $0x440] sm:$0xf]
    %v297 = vld [vmem:[%s0 + $0x444] sm:$0xf]
    %v298 = vld [vmem:[%s0 + $0x448] sm:$0x3]
    %v299 = vld [vmem:[%s0 + $0x44c] sm:$0xf]
    %v300 = vld [vmem:[%s0 + $0x450] sm:$0xf]
    %v301 = vld [vmem:[%s0 + $0x454] sm:$0xf]
    %v302 = vld [vmem:[%s0 + $0x458] sm:$0xf]
    %v303 = vld [vmem:[%s0 + $0x45c] sm:$0x3]
    %v304 = vld [vmem:[%s0 + $0x460] sm:$0xf]
    %v305 = vld [vmem:[%s0 + $0x464] sm:$0xf]
    %v306 = vld [vmem:[%s0 + $0x468] sm:$0xf]
    %v307 = vld [vmem:[%s0 + $0x46c] sm:$0xf]
    %v308 = vld [vmem:[%s0 + $0x470] sm:$0x3]
    %v309 = vld [vmem:[%s0 + $0x474] sm:$0xf]
    %v310 = vld [vmem:[%s0 + $0x478] sm:$0xf]
    %v311 = vld [vmem:[%s0 + $0x47c] sm:$0xf]
    %v312 = vld [vmem:[%s0 + $0x480] sm:$0xf]
    %v313 = vld [vmem:[%s0 + $0x484] sm:$0x3]
    %v314 = vld [vmem:[%s0 + $0x488] sm:$0xf]
    %v315 = vld [vmem:[%s0 + $0x48c] sm:$0xf]
    %v316 = vld [vmem:[%s0 + $0x490] sm:$0xf]
    %v317 = vld [vmem:[%s0 + $0x494] sm:$0xf]
    %v318 = vld [vmem:[%s0 + $0x498] sm:$0x3]
    %v319 = vld [vmem:[%s0 + $0x49c] sm:$0xf]
    %v320 = vld [vmem:[%s0 + $0x4a0] sm:$0xf]
    %v321 = vld [vmem:[%s0 + $0x4a4] sm:$0xf]
    %v322 = vld [vmem:[%s0 + $0x4a8] sm:$0xf]
    %v323 = vld [vmem:[%s0 + $0x4ac] sm:$0x3]
    %v324 = vld [vmem:[%s0 + $0x4b0] sm:$0xf]
    %v325 = vld [vmem:[%s0 + $0x4b4] sm:$0xf]
    %v326 = vld [vmem:[%s0 + $0x4b8] sm:$0xf]
    %v327 = vld [vmem:[%s0 + $0x4bc] sm:$0xf]
    %v328 = vld [vmem:[%s0 + $0x4c0] sm:$0x3]
    %v329 = vld [vmem:[%s0 + $0x4c4] sm:$0xf]
    %v330 = vld [vmem:[%s0 + $0x4c8] sm:$0xf]
    %v331 = vld [vmem:[%s0 + $0x4cc] sm:$0xf]
    %v332 = vld [vmem:[%s0 + $0x4d0] sm:$0xf]
    %v333 = vld [vmem:[%s0 + $0x4d4] sm:$0x3]
    %v334 = vld [vmem:[%s0 + $0x4d8] sm:$0xf]
    %v335 = vld [vmem:[%s0 + $0x4dc] sm:$0xf]
    %v336 = vld [vmem:[%s0 + $0x4e0] sm:$0xf]
    %v337 = vld [vmem:[%s0 + $0x4e4] sm:$0xf]
    %v338 = vld [vmem:[%s0 + $0x4e8] sm:$0x3]
    %v339 = vld [vmem:[%s0 + $0x4ec] sm:$0xf]
    %v340 = vld [vmem:[%s0 + $0x4f0] sm:$0xf]
    %v341 = vld [vmem:[%s0 + $0x4f4] sm:$0xf]
    %v342 = vld [vmem:[%s0 + $0x4f8] sm:$0xf]
    %v343 = vld [vmem:[%s0 + $0x4fc] sm:$0x3]
    %v344 = vld [vmem:[%s2] sm:$0xff]
    %v345 = vld [vmem:[%s2 + $0x8] sm:$0xff]
    %347 = vset.pattern.permute.xlu0 0
    %348 = vperm.xlu0 %347, %v344
    %v349 = vpop.permute.xlu0 %348
    %352 = vset.pattern.permute.xlu0 0
    %353 = vperm.xlu0 %352, %v345
    %v354 = vpop.permute.xlu0 %353
    %v358 = vunpack.c.l.b16 %v22
    %v359 = vunpack.c.l.b16 %v23
    %v360 = vpack.c.b16 %v359, %v358
    %v366 = vunpack.c.l.b16 %v24
    %v367 = vunpack.c.l.b16 %v25
    %v368 = vunpack.c.l.b16 %v26
    %v369 = vunpack.c.l.b16 %v27
    %v370 = vunpack.c.l.b16 %v28
    %v371 = vpack.c.b16 %v367, %v366
    %v372 = vpack.c.b16 %v369, %v368
    %v373 = vpack.c.b16 %v370, %v370
    %vm376 = vcmask 293888
    %v378 = vsel %vm376, %v360, 0
    %vm380 = vcmask 1041408
    %v382 = vsel %vm380, %v373, 0
    %384 = vmatpush.bf16.msra.mxu0 0
    %385 = vmatpush.bf16.msra.mxu0 0
    %386 = vmatpush.bf16.msra.mxu0 0
    %387 = vmatpush.bf16.msra.mxu0 0
    %388 = vmatpush.bf16.msra.mxu0 0
    %389 = vmatpush.bf16.msra.mxu0 %v382
    %390 = vmatpush.bf16.msra.mxu0 %v372
    %391 = vmatpush.bf16.msra.mxu0 %v371
    %392 = vmatmul.bf16.gmra.mxu0 %v378
    %v393 = vpop.f32.mrf.mxu0
    %v394 = vadd.f32 %v349, %v393
    %v395 = vpop.f32.mrf.mxu0
    %v396 = vadd.f32 %v354, %v395
    %397 = vdwg.mxu0
    %v403 = vunpack.c.l.b16 %v29
    %v404 = vunpack.c.l.b16 %v30
    %v405 = vunpack.c.l.b16 %v31
    %v406 = vunpack.c.l.b16 %v32
    %v407 = vunpack.c.l.b16 %v33
    %v408 = vpack.c.b16 %v404, %v403
    %v409 = vpack.c.b16 %v406, %v405
    %v410 = vpack.c.b16 %v407, %v407
    %v414 = vsel %vm380, %v410, 0
    %416 = vmatpush.bf16.msra.mxu0 0
    %417 = vmatpush.bf16.msra.mxu0 0
    %418 = vmatpush.bf16.msra.mxu0 0
    %419 = vmatpush.bf16.msra.mxu0 0
    %420 = vmatpush.bf16.msra.mxu0 0
    %421 = vmatpush.bf16.msra.mxu0 %v414
    %422 = vmatpush.bf16.msra.mxu0 %v409
    %423 = vmatpush.bf16.msra.mxu0 %v408
    %424 = vmatmul.bf16.gmra.mxu0 %v378
    %v425 = vpop.f32.mrf.mxu0
    %v426 = vadd.f32 %v349, %v425
    %v427 = vpop.f32.mrf.mxu0
    %v428 = vadd.f32 %v354, %v427
    %429 = vdwg.mxu0
    %v435 = vunpack.c.l.b16 %v34
    %v436 = vunpack.c.l.b16 %v35
    %v437 = vunpack.c.l.b16 %v36
    %v438 = vunpack.c.l.b16 %v37
    %v439 = vunpack.c.l.b16 %v38
    %v440 = vpack.c.b16 %v436, %v435
    %v441 = vpack.c.b16 %v438, %v437
    %v442 = vpack.c.b16 %v439, %v439
    %v446 = vsel %vm380, %v442, 0
    %448 = vmatpush.bf16.msra.mxu0 0
    %449 = vmatpush.bf16.msra.mxu0 0
    %450 = vmatpush.bf16.msra.mxu0 0
    %451 = vmatpush.bf16.msra.mxu0 0
    %452 = vmatpush.bf16.msra.mxu0 0
    %453 = vmatpush.bf16.msra.mxu0 %v446
    %454 = vmatpush.bf16.msra.mxu0 %v441
    %455 = vmatpush.bf16.msra.mxu0 %v440
    %456 = vmatmul.bf16.gmra.mxu0 %v378
    %v457 = vpop.f32.mrf.mxu0
    %v458 = vadd.f32 %v349, %v457
    %v459 = vpop.f32.mrf.mxu0
    %v460 = vadd.f32 %v354, %v459
    %461 = vdwg.mxu0
    %v467 = vunpack.c.l.b16 %v39
    %v468 = vunpack.c.l.b16 %v40
    %v469 = vunpack.c.l.b16 %v41
    %v470 = vunpack.c.l.b16 %v42
    %v471 = vunpack.c.l.b16 %v43
    %v472 = vpack.c.b16 %v468, %v467
    %v473 = vpack.c.b16 %v470, %v469
    %v474 = vpack.c.b16 %v471, %v471
    %v478 = vsel %vm380, %v474, 0
    %480 = vmatpush.bf16.msra.mxu0 0
    %481 = vmatpush.bf16.msra.mxu0 0
    %482 = vmatpush.bf16.msra.mxu0 0
    %483 = vmatpush.bf16.msra.mxu0 0
    %484 = vmatpush.bf16.msra.mxu0 0
    %485 = vmatpush.bf16.msra.mxu0 %v478
    %486 = vmatpush.bf16.msra.mxu0 %v473
    %487 = vmatpush.bf16.msra.mxu0 %v472
    %488 = vmatmul.bf16.gmra.mxu0 %v378
    %v489 = vpop.f32.mrf.mxu0
    %v490 = vadd.f32 %v349, %v489
    %v491 = vpop.f32.mrf.mxu0
    %v492 = vadd.f32 %v354, %v491
    %493 = vdwg.mxu0
    %v499 = vunpack.c.l.b16 %v44
    %v500 = vunpack.c.l.b16 %v45
    %v501 = vunpack.c.l.b16 %v46
    %v502 = vunpack.c.l.b16 %v47
    %v503 = vunpack.c.l.b16 %v48
    %v504 = vpack.c.b16 %v500, %v499
    %v505 = vpack.c.b16 %v502, %v501
    %v506 = vpack.c.b16 %v503, %v503
    %v510 = vsel %vm380, %v506, 0
    %512 = vmatpush.bf16.msra.mxu0 0
    %513 = vmatpush.bf16.msra.mxu0 0
    %514 = vmatpush.bf16.msra.mxu0 0
    %515 = vmatpush.bf16.msra.mxu0 0
    %516 = vmatpush.bf16.msra.mxu0 0
    %517 = vmatpush.bf16.msra.mxu0 %v510
    %518 = vmatpush.bf16.msra.mxu0 %v505
    %519 = vmatpush.bf16.msra.mxu0 %v504
    %520 = vmatmul.bf16.gmra.mxu0 %v378
    %v521 = vpop.f32.mrf.mxu0
    %v522 = vadd.f32 %v349, %v521
    %v523 = vpop.f32.mrf.mxu0
    %v524 = vadd.f32 %v354, %v523
    %525 = vdwg.mxu0
    %v531 = vunpack.c.l.b16 %v49
    %v532 = vunpack.c.l.b16 %v50
    %v533 = vunpack.c.l.b16 %v51
    %v534 = vunpack.c.l.b16 %v52
    %v535 = vunpack.c.l.b16 %v53
    %v536 = vpack.c.b16 %v532, %v531
    %v537 = vpack.c.b16 %v534, %v533
    %v538 = vpack.c.b16 %v535, %v535
    %v542 = vsel %vm380, %v538, 0
    %544 = vmatpush.bf16.msra.mxu0 0
    %545 = vmatpush.bf16.msra.mxu0 0
    %546 = vmatpush.bf16.msra.mxu0 0
    %547 = vmatpush.bf16.msra.mxu0 0
    %548 = vmatpush.bf16.msra.mxu0 0
    %549 = vmatpush.bf16.msra.mxu0 %v542
    %550 = vmatpush.bf16.msra.mxu0 %v537
    %551 = vmatpush.bf16.msra.mxu0 %v536
    %552 = vmatmul.bf16.gmra.mxu0 %v378
    %v553 = vpop.f32.mrf.mxu0
    %v554 = vadd.f32 %v349, %v553
    %v555 = vpop.f32.mrf.mxu0
    %v556 = vadd.f32 %v354, %v555
    %557 = vdwg.mxu0
    %v563 = vunpack.c.l.b16 %v54
    %v564 = vunpack.c.l.b16 %v55
    %v565 = vunpack.c.l.b16 %v56
    %v566 = vunpack.c.l.b16 %v57
    %v567 = vunpack.c.l.b16 %v58
    %v568 = vpack.c.b16 %v564, %v563
    %v569 = vpack.c.b16 %v566, %v565
    %v570 = vpack.c.b16 %v567, %v567
    %v574 = vsel %vm380, %v570, 0
    %576 = vmatpush.bf16.msra.mxu0 0
    %577 = vmatpush.bf16.msra.mxu0 0
    %578 = vmatpush.bf16.msra.mxu0 0
    %579 = vmatpush.bf16.msra.mxu0 0
    %580 = vmatpush.bf16.msra.mxu0 0
    %581 = vmatpush.bf16.msra.mxu0 %v574
    %582 = vmatpush.bf16.msra.mxu0 %v569
    %583 = vmatpush.bf16.msra.mxu0 %v568
    %584 = vmatmul.bf16.gmra.mxu0 %v378
    %v585 = vpop.f32.mrf.mxu0
    %v586 = vadd.f32 %v349, %v585
    %v587 = vpop.f32.mrf.mxu0
    %v588 = vadd.f32 %v354, %v587
    %589 = vdwg.mxu0
    %v595 = vunpack.c.l.b16 %v59
    %v596 = vunpack.c.l.b16 %v60
    %v597 = vunpack.c.l.b16 %v61
    %v598 = vunpack.c.l.b16 %v62
    %v599 = vunpack.c.l.b16 %v63
    %v600 = vpack.c.b16 %v596, %v595
    %v601 = vpack.c.b16 %v598, %v597
    %v602 = vpack.c.b16 %v599, %v599
    %v606 = vsel %vm380, %v602, 0
    %608 = vmatpush.bf16.msra.mxu0 0
    %609 = vmatpush.bf16.msra.mxu0 0
    %610 = vmatpush.bf16.msra.mxu0 0
    %611 = vmatpush.bf16.msra.mxu0 0
    %612 = vmatpush.bf16.msra.mxu0 0
    %613 = vmatpush.bf16.msra.mxu0 %v606
    %614 = vmatpush.bf16.msra.mxu0 %v601
    %615 = vmatpush.bf16.msra.mxu0 %v600
    %616 = vmatmul.bf16.gmra.mxu0 %v378
    %v617 = vpop.f32.mrf.mxu0
    %v618 = vadd.f32 %v349, %v617
    %v619 = vpop.f32.mrf.mxu0
    %v620 = vadd.f32 %v354, %v619
    %621 = vdwg.mxu0
    %v627 = vunpack.c.l.b16 %v64
    %v628 = vunpack.c.l.b16 %v65
    %v629 = vunpack.c.l.b16 %v66
    %v630 = vunpack.c.l.b16 %v67
    %v631 = vunpack.c.l.b16 %v68
    %v632 = vpack.c.b16 %v628, %v627
    %v633 = vpack.c.b16 %v630, %v629
    %v634 = vpack.c.b16 %v631, %v631
    %v638 = vsel %vm380, %v634, 0
    %640 = vmatpush.bf16.msra.mxu0 0
    %641 = vmatpush.bf16.msra.mxu0 0
    %642 = vmatpush.bf16.msra.mxu0 0
    %643 = vmatpush.bf16.msra.mxu0 0
    %644 = vmatpush.bf16.msra.mxu0 0
    %645 = vmatpush.bf16.msra.mxu0 %v638
    %646 = vmatpush.bf16.msra.mxu0 %v633
    %647 = vmatpush.bf16.msra.mxu0 %v632
    %648 = vmatmul.bf16.gmra.mxu0 %v378
    %v649 = vpop.f32.mrf.mxu0
    %v650 = vadd.f32 %v349, %v649
    %v651 = vpop.f32.mrf.mxu0
    %v652 = vadd.f32 %v354, %v651
    %653 = vdwg.mxu0
    %v659 = vunpack.c.l.b16 %v69
    %v660 = vunpack.c.l.b16 %v70
    %v661 = vunpack.c.l.b16 %v71
    %v662 = vunpack.c.l.b16 %v72
    %v663 = vunpack.c.l.b16 %v73
    %v664 = vpack.c.b16 %v660, %v659
    %v665 = vpack.c.b16 %v662, %v661
    %v666 = vpack.c.b16 %v663, %v663
    %v670 = vsel %vm380, %v666, 0
    %672 = vmatpush.bf16.msra.mxu0 0
    %673 = vmatpush.bf16.msra.mxu0 0
    %674 = vmatpush.bf16.msra.mxu0 0
    %675 = vmatpush.bf16.msra.mxu0 0
    %676 = vmatpush.bf16.msra.mxu0 0
    %677 = vmatpush.bf16.msra.mxu0 %v670
    %678 = vmatpush.bf16.msra.mxu0 %v665
    %679 = vmatpush.bf16.msra.mxu0 %v664
    %680 = vmatmul.bf16.gmra.mxu0 %v378
    %v681 = vpop.f32.mrf.mxu0
    %v682 = vadd.f32 %v349, %v681
    %v683 = vpop.f32.mrf.mxu0
    %v684 = vadd.f32 %v354, %v683
    %685 = vdwg.mxu0
    %v691 = vunpack.c.l.b16 %v74
    %v692 = vunpack.c.l.b16 %v75
    %v693 = vunpack.c.l.b16 %v76
    %v694 = vunpack.c.l.b16 %v77
    %v695 = vunpack.c.l.b16 %v78
    %v696 = vpack.c.b16 %v692, %v691
    %v697 = vpack.c.b16 %v694, %v693
    %v698 = vpack.c.b16 %v695, %v695
    %v702 = vsel %vm380, %v698, 0
    %704 = vmatpush.bf16.msra.mxu0 0
    %705 = vmatpush.bf16.msra.mxu0 0
    %706 = vmatpush.bf16.msra.mxu0 0
    %707 = vmatpush.bf16.msra.mxu0 0
    %708 = vmatpush.bf16.msra.mxu0 0
    %709 = vmatpush.bf16.msra.mxu0 %v702
    %710 = vmatpush.bf16.msra.mxu0 %v697
    %711 = vmatpush.bf16.msra.mxu0 %v696
    %712 = vmatmul.bf16.gmra.mxu0 %v378
    %v713 = vpop.f32.mrf.mxu0
    %v714 = vadd.f32 %v349, %v713
    %v715 = vpop.f32.mrf.mxu0
    %v716 = vadd.f32 %v354, %v715
    %717 = vdwg.mxu0
    %v723 = vunpack.c.l.b16 %v79
    %v724 = vunpack.c.l.b16 %v80
    %v725 = vunpack.c.l.b16 %v81
    %v726 = vunpack.c.l.b16 %v82
    %v727 = vunpack.c.l.b16 %v83
    %v728 = vpack.c.b16 %v724, %v723
    %v729 = vpack.c.b16 %v726, %v725
    %v730 = vpack.c.b16 %v727, %v727
    %v734 = vsel %vm380, %v730, 0
    %736 = vmatpush.bf16.msra.mxu0 0
    %737 = vmatpush.bf16.msra.mxu0 0
    %738 = vmatpush.bf16.msra.mxu0 0
    %739 = vmatpush.bf16.msra.mxu0 0
    %740 = vmatpush.bf16.msra.mxu0 0
    %741 = vmatpush.bf16.msra.mxu0 %v734
    %742 = vmatpush.bf16.msra.mxu0 %v729
    %743 = vmatpush.bf16.msra.mxu0 %v728
    %744 = vmatmul.bf16.gmra.mxu0 %v378
    %v745 = vpop.f32.mrf.mxu0
    %v746 = vadd.f32 %v349, %v745
    %v747 = vpop.f32.mrf.mxu0
    %v748 = vadd.f32 %v354, %v747
    %749 = vdwg.mxu0
    %v755 = vunpack.c.l.b16 %v84
    %v756 = vunpack.c.l.b16 %v85
    %v757 = vunpack.c.l.b16 %v86
    %v758 = vunpack.c.l.b16 %v87
    %v759 = vunpack.c.l.b16 %v88
    %v760 = vpack.c.b16 %v756, %v755
    %v761 = vpack.c.b16 %v758, %v757
    %v762 = vpack.c.b16 %v759, %v759
    %v766 = vsel %vm380, %v762, 0
    %768 = vmatpush.bf16.msra.mxu0 0
    %769 = vmatpush.bf16.msra.mxu0 0
    %770 = vmatpush.bf16.msra.mxu0 0
    %771 = vmatpush.bf16.msra.mxu0 0
    %772 = vmatpush.bf16.msra.mxu0 0
    %773 = vmatpush.bf16.msra.mxu0 %v766
    %774 = vmatpush.bf16.msra.mxu0 %v761
    %775 = vmatpush.bf16.msra.mxu0 %v760
    %776 = vmatmul.bf16.gmra.mxu0 %v378
    %v777 = vpop.f32.mrf.mxu0
    %v778 = vadd.f32 %v349, %v777
    %v779 = vpop.f32.mrf.mxu0
    %v780 = vadd.f32 %v354, %v779
    %781 = vdwg.mxu0
    %v787 = vunpack.c.l.b16 %v89
    %v788 = vunpack.c.l.b16 %v90
    %v789 = vunpack.c.l.b16 %v91
    %v790 = vunpack.c.l.b16 %v92
    %v791 = vunpack.c.l.b16 %v93
    %v792 = vpack.c.b16 %v788, %v787
    %v793 = vpack.c.b16 %v790, %v789
    %v794 = vpack.c.b16 %v791, %v791
    %v798 = vsel %vm380, %v794, 0
    %800 = vmatpush.bf16.msra.mxu0 0
    %801 = vmatpush.bf16.msra.mxu0 0
    %802 = vmatpush.bf16.msra.mxu0 0
    %803 = vmatpush.bf16.msra.mxu0 0
    %804 = vmatpush.bf16.msra.mxu0 0
    %805 = vmatpush.bf16.msra.mxu0 %v798
    %806 = vmatpush.bf16.msra.mxu0 %v793
    %807 = vmatpush.bf16.msra.mxu0 %v792
    %808 = vmatmul.bf16.gmra.mxu0 %v378
    %v809 = vpop.f32.mrf.mxu0
    %v810 = vadd.f32 %v349, %v809
    %v811 = vpop.f32.mrf.mxu0
    %v812 = vadd.f32 %v354, %v811
    %813 = vdwg.mxu0
    %v819 = vunpack.c.l.b16 %v94
    %v820 = vunpack.c.l.b16 %v95
    %v821 = vunpack.c.l.b16 %v96
    %v822 = vunpack.c.l.b16 %v97
    %v823 = vunpack.c.l.b16 %v98
    %v824 = vpack.c.b16 %v820, %v819
    %v825 = vpack.c.b16 %v822, %v821
    %v826 = vpack.c.b16 %v823, %v823
    %v830 = vsel %vm380, %v826, 0
    %832 = vmatpush.bf16.msra.mxu0 0
    %833 = vmatpush.bf16.msra.mxu0 0
    %834 = vmatpush.bf16.msra.mxu0 0
    %835 = vmatpush.bf16.msra.mxu0 0
    %836 = vmatpush.bf16.msra.mxu0 0
    %837 = vmatpush.bf16.msra.mxu0 %v830
    %838 = vmatpush.bf16.msra.mxu0 %v825
    %839 = vmatpush.bf16.msra.mxu0 %v824
    %840 = vmatmul.bf16.gmra.mxu0 %v378
    %v841 = vpop.f32.mrf.mxu0
    %v842 = vadd.f32 %v349, %v841
    %v843 = vpop.f32.mrf.mxu0
    %v844 = vadd.f32 %v354, %v843
    %845 = vdwg.mxu0
    %v851 = vunpack.c.l.b16 %v99
    %v852 = vunpack.c.l.b16 %v100
    %v853 = vunpack.c.l.b16 %v101
    %v854 = vunpack.c.l.b16 %v102
    %v855 = vunpack.c.l.b16 %v103
    %v856 = vpack.c.b16 %v852, %v851
    %v857 = vpack.c.b16 %v854, %v853
    %v858 = vpack.c.b16 %v855, %v855
    %v862 = vsel %vm380, %v858, 0
    %864 = vmatpush.bf16.msra.mxu0 0
    %865 = vmatpush.bf16.msra.mxu0 0
    %866 = vmatpush.bf16.msra.mxu0 0
    %867 = vmatpush.bf16.msra.mxu0 0
    %868 = vmatpush.bf16.msra.mxu0 0
    %869 = vmatpush.bf16.msra.mxu0 %v862
    %870 = vmatpush.bf16.msra.mxu0 %v857
    %871 = vmatpush.bf16.msra.mxu0 %v856
    %872 = vmatmul.bf16.gmra.mxu0 %v378
    %v873 = vpop.f32.mrf.mxu0
    %v874 = vadd.f32 %v349, %v873
    %v875 = vpop.f32.mrf.mxu0
    %v876 = vadd.f32 %v354, %v875
    %877 = vdwg.mxu0
    %v883 = vunpack.c.l.b16 %v104
    %v884 = vunpack.c.l.b16 %v105
    %v885 = vunpack.c.l.b16 %v106
    %v886 = vunpack.c.l.b16 %v107
    %v887 = vunpack.c.l.b16 %v108
    %v888 = vpack.c.b16 %v884, %v883
    %v889 = vpack.c.b16 %v886, %v885
    %v890 = vpack.c.b16 %v887, %v887
    %v894 = vsel %vm380, %v890, 0
    %896 = vmatpush.bf16.msra.mxu0 0
    %897 = vmatpush.bf16.msra.mxu0 0
    %898 = vmatpush.bf16.msra.mxu0 0
    %899 = vmatpush.bf16.msra.mxu0 0
    %900 = vmatpush.bf16.msra.mxu0 0
    %901 = vmatpush.bf16.msra.mxu0 %v894
    %902 = vmatpush.bf16.msra.mxu0 %v889
    %903 = vmatpush.bf16.msra.mxu0 %v888
    %904 = vmatmul.bf16.gmra.mxu0 %v378
    %v905 = vpop.f32.mrf.mxu0
    %v906 = vadd.f32 %v349, %v905
    %v907 = vpop.f32.mrf.mxu0
    %v908 = vadd.f32 %v354, %v907
    %909 = vdwg.mxu0
    %v915 = vunpack.c.l.b16 %v109
    %v916 = vunpack.c.l.b16 %v110
    %v917 = vunpack.c.l.b16 %v111
    %v918 = vunpack.c.l.b16 %v112
    %v919 = vunpack.c.l.b16 %v113
    %v920 = vpack.c.b16 %v916, %v915
    %v921 = vpack.c.b16 %v918, %v917
    %v922 = vpack.c.b16 %v919, %v919
    %v926 = vsel %vm380, %v922, 0
    %928 = vmatpush.bf16.msra.mxu0 0
    %929 = vmatpush.bf16.msra.mxu0 0
    %930 = vmatpush.bf16.msra.mxu0 0
    %931 = vmatpush.bf16.msra.mxu0 0
    %932 = vmatpush.bf16.msra.mxu0 0
    %933 = vmatpush.bf16.msra.mxu0 %v926
    %934 = vmatpush.bf16.msra.mxu0 %v921
    %935 = vmatpush.bf16.msra.mxu0 %v920
    %936 = vmatmul.bf16.gmra.mxu0 %v378
    %v937 = vpop.f32.mrf.mxu0
    %v938 = vadd.f32 %v349, %v937
    %v939 = vpop.f32.mrf.mxu0
    %v940 = vadd.f32 %v354, %v939
    %941 = vdwg.mxu0
    %v947 = vunpack.c.l.b16 %v114
    %v948 = vunpack.c.l.b16 %v115
    %v949 = vunpack.c.l.b16 %v116
    %v950 = vunpack.c.l.b16 %v117
    %v951 = vunpack.c.l.b16 %v118
    %v952 = vpack.c.b16 %v948, %v947
    %v953 = vpack.c.b16 %v950, %v949
    %v954 = vpack.c.b16 %v951, %v951
    %v958 = vsel %vm380, %v954, 0
    %960 = vmatpush.bf16.msra.mxu0 0
    %961 = vmatpush.bf16.msra.mxu0 0
    %962 = vmatpush.bf16.msra.mxu0 0
    %963 = vmatpush.bf16.msra.mxu0 0
    %964 = vmatpush.bf16.msra.mxu0 0
    %965 = vmatpush.bf16.msra.mxu0 %v958
    %966 = vmatpush.bf16.msra.mxu0 %v953
    %967 = vmatpush.bf16.msra.mxu0 %v952
    %968 = vmatmul.bf16.gmra.mxu0 %v378
    %v969 = vpop.f32.mrf.mxu0
    %v970 = vadd.f32 %v349, %v969
    %v971 = vpop.f32.mrf.mxu0
    %v972 = vadd.f32 %v354, %v971
    %973 = vdwg.mxu0
    %v979 = vunpack.c.l.b16 %v119
    %v980 = vunpack.c.l.b16 %v120
    %v981 = vunpack.c.l.b16 %v121
    %v982 = vunpack.c.l.b16 %v122
    %v983 = vunpack.c.l.b16 %v123
    %v984 = vpack.c.b16 %v980, %v979
    %v985 = vpack.c.b16 %v982, %v981
    %v986 = vpack.c.b16 %v983, %v983
    %v990 = vsel %vm380, %v986, 0
    %992 = vmatpush.bf16.msra.mxu0 0
    %993 = vmatpush.bf16.msra.mxu0 0
    %994 = vmatpush.bf16.msra.mxu0 0
    %995 = vmatpush.bf16.msra.mxu0 0
    %996 = vmatpush.bf16.msra.mxu0 0
    %997 = vmatpush.bf16.msra.mxu0 %v990
    %998 = vmatpush.bf16.msra.mxu0 %v985
    %999 = vmatpush.bf16.msra.mxu0 %v984
    %1000 = vmatmul.bf16.gmra.mxu0 %v378
    %v1001 = vpop.f32.mrf.mxu0
    %v1002 = vadd.f32 %v349, %v1001
    %v1003 = vpop.f32.mrf.mxu0
    %v1004 = vadd.f32 %v354, %v1003
    %1005 = vdwg.mxu0
    %v1011 = vunpack.c.l.b16 %v124
    %v1012 = vunpack.c.l.b16 %v125
    %v1013 = vunpack.c.l.b16 %v126
    %v1014 = vunpack.c.l.b16 %v127
    %v1015 = vunpack.c.l.b16 %v128
    %v1016 = vpack.c.b16 %v1012, %v1011
    %v1017 = vpack.c.b16 %v1014, %v1013
    %v1018 = vpack.c.b16 %v1015, %v1015
    %v1022 = vsel %vm380, %v1018, 0
    %1024 = vmatpush.bf16.msra.mxu0 0
    %1025 = vmatpush.bf16.msra.mxu0 0
    %1026 = vmatpush.bf16.msra.mxu0 0
    %1027 = vmatpush.bf16.msra.mxu0 0
    %1028 = vmatpush.bf16.msra.mxu0 0
    %1029 = vmatpush.bf16.msra.mxu0 %v1022
    %1030 = vmatpush.bf16.msra.mxu0 %v1017
    %1031 = vmatpush.bf16.msra.mxu0 %v1016
    %1032 = vmatmul.bf16.gmra.mxu0 %v378
    %v1033 = vpop.f32.mrf.mxu0
    %v1034 = vadd.f32 %v349, %v1033
    %v1035 = vpop.f32.mrf.mxu0
    %v1036 = vadd.f32 %v354, %v1035
    %1037 = vdwg.mxu0
    %v1043 = vunpack.c.l.b16 %v129
    %v1044 = vunpack.c.l.b16 %v130
    %v1045 = vunpack.c.l.b16 %v131
    %v1046 = vunpack.c.l.b16 %v132
    %v1047 = vunpack.c.l.b16 %v133
    %v1048 = vpack.c.b16 %v1044, %v1043
    %v1049 = vpack.c.b16 %v1046, %v1045
    %v1050 = vpack.c.b16 %v1047, %v1047
    %v1054 = vsel %vm380, %v1050, 0
    %1056 = vmatpush.bf16.msra.mxu0 0
    %1057 = vmatpush.bf16.msra.mxu0 0
    %1058 = vmatpush.bf16.msra.mxu0 0
    %1059 = vmatpush.bf16.msra.mxu0 0
    %1060 = vmatpush.bf16.msra.mxu0 0
    %1061 = vmatpush.bf16.msra.mxu0 %v1054
    %1062 = vmatpush.bf16.msra.mxu0 %v1049
    %1063 = vmatpush.bf16.msra.mxu0 %v1048
    %1064 = vmatmul.bf16.gmra.mxu0 %v378
    %v1065 = vpop.f32.mrf.mxu0
    %v1066 = vadd.f32 %v349, %v1065
    %v1067 = vpop.f32.mrf.mxu0
    %v1068 = vadd.f32 %v354, %v1067
    %1069 = vdwg.mxu0
    %v1075 = vunpack.c.l.b16 %v134
    %v1076 = vunpack.c.l.b16 %v135
    %v1077 = vunpack.c.l.b16 %v136
    %v1078 = vunpack.c.l.b16 %v137
    %v1079 = vunpack.c.l.b16 %v138
    %v1080 = vpack.c.b16 %v1076, %v1075
    %v1081 = vpack.c.b16 %v1078, %v1077
    %v1082 = vpack.c.b16 %v1079, %v1079
    %v1086 = vsel %vm380, %v1082, 0
    %1088 = vmatpush.bf16.msra.mxu0 0
    %1089 = vmatpush.bf16.msra.mxu0 0
    %1090 = vmatpush.bf16.msra.mxu0 0
    %1091 = vmatpush.bf16.msra.mxu0 0
    %1092 = vmatpush.bf16.msra.mxu0 0
    %1093 = vmatpush.bf16.msra.mxu0 %v1086
    %1094 = vmatpush.bf16.msra.mxu0 %v1081
    %1095 = vmatpush.bf16.msra.mxu0 %v1080
    %1096 = vmatmul.bf16.gmra.mxu0 %v378
    %v1097 = vpop.f32.mrf.mxu0
    %v1098 = vadd.f32 %v349, %v1097
    %v1099 = vpop.f32.mrf.mxu0
    %v1100 = vadd.f32 %v354, %v1099
    %1101 = vdwg.mxu0
    %v1107 = vunpack.c.l.b16 %v139
    %v1108 = vunpack.c.l.b16 %v140
    %v1109 = vunpack.c.l.b16 %v141
    %v1110 = vunpack.c.l.b16 %v142
    %v1111 = vunpack.c.l.b16 %v143
    %v1112 = vpack.c.b16 %v1108, %v1107
    %v1113 = vpack.c.b16 %v1110, %v1109
    %v1114 = vpack.c.b16 %v1111, %v1111
    %v1118 = vsel %vm380, %v1114, 0
    %1120 = vmatpush.bf16.msra.mxu0 0
    %1121 = vmatpush.bf16.msra.mxu0 0
    %1122 = vmatpush.bf16.msra.mxu0 0
    %1123 = vmatpush.bf16.msra.mxu0 0
    %1124 = vmatpush.bf16.msra.mxu0 0
    %1125 = vmatpush.bf16.msra.mxu0 %v1118
    %1126 = vmatpush.bf16.msra.mxu0 %v1113
    %1127 = vmatpush.bf16.msra.mxu0 %v1112
    %1128 = vmatmul.bf16.gmra.mxu0 %v378
    %v1129 = vpop.f32.mrf.mxu0
    %v1130 = vadd.f32 %v349, %v1129
    %v1131 = vpop.f32.mrf.mxu0
    %v1132 = vadd.f32 %v354, %v1131
    %1133 = vdwg.mxu0
    %v1139 = vunpack.c.l.b16 %v144
    %v1140 = vunpack.c.l.b16 %v145
    %v1141 = vunpack.c.l.b16 %v146
    %v1142 = vunpack.c.l.b16 %v147
    %v1143 = vunpack.c.l.b16 %v148
    %v1144 = vpack.c.b16 %v1140, %v1139
    %v1145 = vpack.c.b16 %v1142, %v1141
    %v1146 = vpack.c.b16 %v1143, %v1143
    %v1150 = vsel %vm380, %v1146, 0
    %1152 = vmatpush.bf16.msra.mxu0 0
    %1153 = vmatpush.bf16.msra.mxu0 0
    %1154 = vmatpush.bf16.msra.mxu0 0
    %1155 = vmatpush.bf16.msra.mxu0 0
    %1156 = vmatpush.bf16.msra.mxu0 0
    %1157 = vmatpush.bf16.msra.mxu0 %v1150
    %1158 = vmatpush.bf16.msra.mxu0 %v1145
    %1159 = vmatpush.bf16.msra.mxu0 %v1144
    %1160 = vmatmul.bf16.gmra.mxu0 %v378
    %v1161 = vpop.f32.mrf.mxu0
    %v1162 = vadd.f32 %v349, %v1161
    %v1163 = vpop.f32.mrf.mxu0
    %v1164 = vadd.f32 %v354, %v1163
    %1165 = vdwg.mxu0
    %v1171 = vunpack.c.l.b16 %v149
    %v1172 = vunpack.c.l.b16 %v150
    %v1173 = vunpack.c.l.b16 %v151
    %v1174 = vunpack.c.l.b16 %v152
    %v1175 = vunpack.c.l.b16 %v153
    %v1176 = vpack.c.b16 %v1172, %v1171
    %v1177 = vpack.c.b16 %v1174, %v1173
    %v1178 = vpack.c.b16 %v1175, %v1175
    %v1182 = vsel %vm380, %v1178, 0
    %1184 = vmatpush.bf16.msra.mxu0 0
    %1185 = vmatpush.bf16.msra.mxu0 0
    %1186 = vmatpush.bf16.msra.mxu0 0
    %1187 = vmatpush.bf16.msra.mxu0 0
    %1188 = vmatpush.bf16.msra.mxu0 0
    %1189 = vmatpush.bf16.msra.mxu0 %v1182
    %1190 = vmatpush.bf16.msra.mxu0 %v1177
    %1191 = vmatpush.bf16.msra.mxu0 %v1176
    %1192 = vmatmul.bf16.gmra.mxu0 %v378
    %v1193 = vpop.f32.mrf.mxu0
    %v1194 = vadd.f32 %v349, %v1193
    %v1195 = vpop.f32.mrf.mxu0
    %v1196 = vadd.f32 %v354, %v1195
    %1197 = vdwg.mxu0
    %v1203 = vunpack.c.l.b16 %v154
    %v1204 = vunpack.c.l.b16 %v155
    %v1205 = vunpack.c.l.b16 %v156
    %v1206 = vunpack.c.l.b16 %v157
    %v1207 = vunpack.c.l.b16 %v158
    %v1208 = vpack.c.b16 %v1204, %v1203
    %v1209 = vpack.c.b16 %v1206, %v1205
    %v1210 = vpack.c.b16 %v1207, %v1207
    %v1214 = vsel %vm380, %v1210, 0
    %1216 = vmatpush.bf16.msra.mxu0 0
    %1217 = vmatpush.bf16.msra.mxu0 0
    %1218 = vmatpush.bf16.msra.mxu0 0
    %1219 = vmatpush.bf16.msra.mxu0 0
    %1220 = vmatpush.bf16.msra.mxu0 0
    %1221 = vmatpush.bf16.msra.mxu0 %v1214
    %1222 = vmatpush.bf16.msra.mxu0 %v1209
    %1223 = vmatpush.bf16.msra.mxu0 %v1208
    %1224 = vmatmul.bf16.gmra.mxu0 %v378
    %v1225 = vpop.f32.mrf.mxu0
    %v1226 = vadd.f32 %v349, %v1225
    %v1227 = vpop.f32.mrf.mxu0
    %v1228 = vadd.f32 %v354, %v1227
    %1229 = vdwg.mxu0
    %v1235 = vunpack.c.l.b16 %v159
    %v1236 = vunpack.c.l.b16 %v160
    %v1237 = vunpack.c.l.b16 %v161
    %v1238 = vunpack.c.l.b16 %v162
    %v1239 = vunpack.c.l.b16 %v163
    %v1240 = vpack.c.b16 %v1236, %v1235
    %v1241 = vpack.c.b16 %v1238, %v1237
    %v1242 = vpack.c.b16 %v1239, %v1239
    %v1246 = vsel %vm380, %v1242, 0
    %1248 = vmatpush.bf16.msra.mxu0 0
    %1249 = vmatpush.bf16.msra.mxu0 0
    %1250 = vmatpush.bf16.msra.mxu0 0
    %1251 = vmatpush.bf16.msra.mxu0 0
    %1252 = vmatpush.bf16.msra.mxu0 0
    %1253 = vmatpush.bf16.msra.mxu0 %v1246
    %1254 = vmatpush.bf16.msra.mxu0 %v1241
    %1255 = vmatpush.bf16.msra.mxu0 %v1240
    %1256 = vmatmul.bf16.gmra.mxu0 %v378
    %v1257 = vpop.f32.mrf.mxu0
    %v1258 = vadd.f32 %v349, %v1257
    %v1259 = vpop.f32.mrf.mxu0
    %v1260 = vadd.f32 %v354, %v1259
    %1261 = vdwg.mxu0
    %v1267 = vunpack.c.l.b16 %v164
    %v1268 = vunpack.c.l.b16 %v165
    %v1269 = vunpack.c.l.b16 %v166
    %v1270 = vunpack.c.l.b16 %v167
    %v1271 = vunpack.c.l.b16 %v168
    %v1272 = vpack.c.b16 %v1268, %v1267
    %v1273 = vpack.c.b16 %v1270, %v1269
    %v1274 = vpack.c.b16 %v1271, %v1271
    %v1278 = vsel %vm380, %v1274, 0
    %1280 = vmatpush.bf16.msra.mxu0 0
    %1281 = vmatpush.bf16.msra.mxu0 0
    %1282 = vmatpush.bf16.msra.mxu0 0
    %1283 = vmatpush.bf16.msra.mxu0 0
    %1284 = vmatpush.bf16.msra.mxu0 0
    %1285 = vmatpush.bf16.msra.mxu0 %v1278
    %1286 = vmatpush.bf16.msra.mxu0 %v1273
    %1287 = vmatpush.bf16.msra.mxu0 %v1272
    %1288 = vmatmul.bf16.gmra.mxu0 %v378
    %v1289 = vpop.f32.mrf.mxu0
    %v1290 = vadd.f32 %v349, %v1289
    %v1291 = vpop.f32.mrf.mxu0
    %v1292 = vadd.f32 %v354, %v1291
    %1293 = vdwg.mxu0
    %v1299 = vunpack.c.l.b16 %v169
    %v1300 = vunpack.c.l.b16 %v170
    %v1301 = vunpack.c.l.b16 %v171
    %v1302 = vunpack.c.l.b16 %v172
    %v1303 = vunpack.c.l.b16 %v173
    %v1304 = vpack.c.b16 %v1300, %v1299
    %v1305 = vpack.c.b16 %v1302, %v1301
    %v1306 = vpack.c.b16 %v1303, %v1303
    %v1310 = vsel %vm380, %v1306, 0
    %1312 = vmatpush.bf16.msra.mxu0 0
    %1313 = vmatpush.bf16.msra.mxu0 0
    %1314 = vmatpush.bf16.msra.mxu0 0
    %1315 = vmatpush.bf16.msra.mxu0 0
    %1316 = vmatpush.bf16.msra.mxu0 0
    %1317 = vmatpush.bf16.msra.mxu0 %v1310
    %1318 = vmatpush.bf16.msra.mxu0 %v1305
    %1319 = vmatpush.bf16.msra.mxu0 %v1304
    %1320 = vmatmul.bf16.gmra.mxu0 %v378
    %v1321 = vpop.f32.mrf.mxu0
    %v1322 = vadd.f32 %v349, %v1321
    %v1323 = vpop.f32.mrf.mxu0
    %v1324 = vadd.f32 %v354, %v1323
    %1325 = vdwg.mxu0
    %v1331 = vunpack.c.l.b16 %v174
    %v1332 = vunpack.c.l.b16 %v175
    %v1333 = vunpack.c.l.b16 %v176
    %v1334 = vunpack.c.l.b16 %v177
    %v1335 = vunpack.c.l.b16 %v178
    %v1336 = vpack.c.b16 %v1332, %v1331
    %v1337 = vpack.c.b16 %v1334, %v1333
    %v1338 = vpack.c.b16 %v1335, %v1335
    %v1342 = vsel %vm380, %v1338, 0
    %1344 = vmatpush.bf16.msra.mxu0 0
    %1345 = vmatpush.bf16.msra.mxu0 0
    %1346 = vmatpush.bf16.msra.mxu0 0
    %1347 = vmatpush.bf16.msra.mxu0 0
    %1348 = vmatpush.bf16.msra.mxu0 0
    %1349 = vmatpush.bf16.msra.mxu0 %v1342
    %1350 = vmatpush.bf16.msra.mxu0 %v1337
    %1351 = vmatpush.bf16.msra.mxu0 %v1336
    %1352 = vmatmul.bf16.gmra.mxu0 %v378
    %v1353 = vpop.f32.mrf.mxu0
    %v1354 = vadd.f32 %v349, %v1353
    %v1355 = vpop.f32.mrf.mxu0
    %v1356 = vadd.f32 %v354, %v1355
    %1357 = vdwg.mxu0
    %v1363 = vunpack.c.l.b16 %v179
    %v1364 = vunpack.c.l.b16 %v180
    %v1365 = vunpack.c.l.b16 %v181
    %v1366 = vunpack.c.l.b16 %v182
    %v1367 = vunpack.c.l.b16 %v183
    %v1368 = vpack.c.b16 %v1364, %v1363
    %v1369 = vpack.c.b16 %v1366, %v1365
    %v1370 = vpack.c.b16 %v1367, %v1367
    %v1374 = vsel %vm380, %v1370, 0
    %1376 = vmatpush.bf16.msra.mxu0 0
    %1377 = vmatpush.bf16.msra.mxu0 0
    %1378 = vmatpush.bf16.msra.mxu0 0
    %1379 = vmatpush.bf16.msra.mxu0 0
    %1380 = vmatpush.bf16.msra.mxu0 0
    %1381 = vmatpush.bf16.msra.mxu0 %v1374
    %1382 = vmatpush.bf16.msra.mxu0 %v1369
    %1383 = vmatpush.bf16.msra.mxu0 %v1368
    %1384 = vmatmul.bf16.gmra.mxu0 %v378
    %v1385 = vpop.f32.mrf.mxu0
    %v1386 = vadd.f32 %v349, %v1385
    %v1387 = vpop.f32.mrf.mxu0
    %v1388 = vadd.f32 %v354, %v1387
    %1389 = vdwg.mxu0
    %v1395 = vunpack.c.l.b16 %v184
    %v1396 = vunpack.c.l.b16 %v185
    %v1397 = vunpack.c.l.b16 %v186
    %v1398 = vunpack.c.l.b16 %v187
    %v1399 = vunpack.c.l.b16 %v188
    %v1400 = vpack.c.b16 %v1396, %v1395
    %v1401 = vpack.c.b16 %v1398, %v1397
    %v1402 = vpack.c.b16 %v1399, %v1399
    %v1406 = vsel %vm380, %v1402, 0
    %1408 = vmatpush.bf16.msra.mxu0 0
    %1409 = vmatpush.bf16.msra.mxu0 0
    %1410 = vmatpush.bf16.msra.mxu0 0
    %1411 = vmatpush.bf16.msra.mxu0 0
    %1412 = vmatpush.bf16.msra.mxu0 0
    %1413 = vmatpush.bf16.msra.mxu0 %v1406
    %1414 = vmatpush.bf16.msra.mxu0 %v1401
    %1415 = vmatpush.bf16.msra.mxu0 %v1400
    %1416 = vmatmul.bf16.gmra.mxu0 %v378
    %v1417 = vpop.f32.mrf.mxu0
    %v1418 = vadd.f32 %v349, %v1417
    %v1419 = vpop.f32.mrf.mxu0
    %v1420 = vadd.f32 %v354, %v1419
    %1421 = vdwg.mxu0
    %v1427 = vunpack.c.l.b16 %v189
    %v1428 = vunpack.c.l.b16 %v190
    %v1429 = vunpack.c.l.b16 %v191
    %v1430 = vunpack.c.l.b16 %v192
    %v1431 = vunpack.c.l.b16 %v193
    %v1432 = vpack.c.b16 %v1428, %v1427
    %v1433 = vpack.c.b16 %v1430, %v1429
    %v1434 = vpack.c.b16 %v1431, %v1431
    %v1438 = vsel %vm380, %v1434, 0
    %1440 = vmatpush.bf16.msra.mxu0 0
    %1441 = vmatpush.bf16.msra.mxu0 0
    %1442 = vmatpush.bf16.msra.mxu0 0
    %1443 = vmatpush.bf16.msra.mxu0 0
    %1444 = vmatpush.bf16.msra.mxu0 0
    %1445 = vmatpush.bf16.msra.mxu0 %v1438
    %1446 = vmatpush.bf16.msra.mxu0 %v1433
    %1447 = vmatpush.bf16.msra.mxu0 %v1432
    %1448 = vmatmul.bf16.gmra.mxu0 %v378
    %v1449 = vpop.f32.mrf.mxu0
    %v1450 = vadd.f32 %v349, %v1449
    %v1451 = vpop.f32.mrf.mxu0
    %v1452 = vadd.f32 %v354, %v1451
    %1453 = vdwg.mxu0
    %v1459 = vunpack.c.l.b16 %v194
    %v1460 = vunpack.c.l.b16 %v195
    %v1461 = vunpack.c.l.b16 %v196
    %v1462 = vunpack.c.l.b16 %v197
    %v1463 = vunpack.c.l.b16 %v198
    %v1464 = vpack.c.b16 %v1460, %v1459
    %v1465 = vpack.c.b16 %v1462, %v1461
    %v1466 = vpack.c.b16 %v1463, %v1463
    %v1470 = vsel %vm380, %v1466, 0
    %1472 = vmatpush.bf16.msra.mxu0 0
    %1473 = vmatpush.bf16.msra.mxu0 0
    %1474 = vmatpush.bf16.msra.mxu0 0
    %1475 = vmatpush.bf16.msra.mxu0 0
    %1476 = vmatpush.bf16.msra.mxu0 0
    %1477 = vmatpush.bf16.msra.mxu0 %v1470
    %1478 = vmatpush.bf16.msra.mxu0 %v1465
    %1479 = vmatpush.bf16.msra.mxu0 %v1464
    %1480 = vmatmul.bf16.gmra.mxu0 %v378
    %v1481 = vpop.f32.mrf.mxu0
    %v1482 = vadd.f32 %v349, %v1481
    %v1483 = vpop.f32.mrf.mxu0
    %v1484 = vadd.f32 %v354, %v1483
    %1485 = vdwg.mxu0
    %v1491 = vunpack.c.l.b16 %v199
    %v1492 = vunpack.c.l.b16 %v200
    %v1493 = vunpack.c.l.b16 %v201
    %v1494 = vunpack.c.l.b16 %v202
    %v1495 = vunpack.c.l.b16 %v203
    %v1496 = vpack.c.b16 %v1492, %v1491
    %v1497 = vpack.c.b16 %v1494, %v1493
    %v1498 = vpack.c.b16 %v1495, %v1495
    %v1502 = vsel %vm380, %v1498, 0
    %1504 = vmatpush.bf16.msra.mxu0 0
    %1505 = vmatpush.bf16.msra.mxu0 0
    %1506 = vmatpush.bf16.msra.mxu0 0
    %1507 = vmatpush.bf16.msra.mxu0 0
    %1508 = vmatpush.bf16.msra.mxu0 0
    %1509 = vmatpush.bf16.msra.mxu0 %v1502
    %1510 = vmatpush.bf16.msra.mxu0 %v1497
    %1511 = vmatpush.bf16.msra.mxu0 %v1496
    %1512 = vmatmul.bf16.gmra.mxu0 %v378
    %v1513 = vpop.f32.mrf.mxu0
    %v1514 = vadd.f32 %v349, %v1513
    %v1515 = vpop.f32.mrf.mxu0
    %v1516 = vadd.f32 %v354, %v1515
    %1517 = vdwg.mxu0
    %v1523 = vunpack.c.l.b16 %v204
    %v1524 = vunpack.c.l.b16 %v205
    %v1525 = vunpack.c.l.b16 %v206
    %v1526 = vunpack.c.l.b16 %v207
    %v1527 = vunpack.c.l.b16 %v208
    %v1528 = vpack.c.b16 %v1524, %v1523
    %v1529 = vpack.c.b16 %v1526, %v1525
    %v1530 = vpack.c.b16 %v1527, %v1527
    %v1534 = vsel %vm380, %v1530, 0
    %1536 = vmatpush.bf16.msra.mxu0 0
    %1537 = vmatpush.bf16.msra.mxu0 0
    %1538 = vmatpush.bf16.msra.mxu0 0
    %1539 = vmatpush.bf16.msra.mxu0 0
    %1540 = vmatpush.bf16.msra.mxu0 0
    %1541 = vmatpush.bf16.msra.mxu0 %v1534
    %1542 = vmatpush.bf16.msra.mxu0 %v1529
    %1543 = vmatpush.bf16.msra.mxu0 %v1528
    %1544 = vmatmul.bf16.gmra.mxu0 %v378
    %v1545 = vpop.f32.mrf.mxu0
    %v1546 = vadd.f32 %v349, %v1545
    %v1547 = vpop.f32.mrf.mxu0
    %v1548 = vadd.f32 %v354, %v1547
    %1549 = vdwg.mxu0
    %v1555 = vunpack.c.l.b16 %v209
    %v1556 = vunpack.c.l.b16 %v210
    %v1557 = vunpack.c.l.b16 %v211
    %v1558 = vunpack.c.l.b16 %v212
    %v1559 = vunpack.c.l.b16 %v213
    %v1560 = vpack.c.b16 %v1556, %v1555
    %v1561 = vpack.c.b16 %v1558, %v1557
    %v1562 = vpack.c.b16 %v1559, %v1559
    %v1566 = vsel %vm380, %v1562, 0
    %1568 = vmatpush.bf16.msra.mxu0 0
    %1569 = vmatpush.bf16.msra.mxu0 0
    %1570 = vmatpush.bf16.msra.mxu0 0
    %1571 = vmatpush.bf16.msra.mxu0 0
    %1572 = vmatpush.bf16.msra.mxu0 0
    %1573 = vmatpush.bf16.msra.mxu0 %v1566
    %1574 = vmatpush.bf16.msra.mxu0 %v1561
    %1575 = vmatpush.bf16.msra.mxu0 %v1560
    %1576 = vmatmul.bf16.gmra.mxu0 %v378
    %v1577 = vpop.f32.mrf.mxu0
    %v1578 = vadd.f32 %v349, %v1577
    %v1579 = vpop.f32.mrf.mxu0
    %v1580 = vadd.f32 %v354, %v1579
    %1581 = vdwg.mxu0
    %v1587 = vunpack.c.l.b16 %v214
    %v1588 = vunpack.c.l.b16 %v215
    %v1589 = vunpack.c.l.b16 %v216
    %v1590 = vunpack.c.l.b16 %v217
    %v1591 = vunpack.c.l.b16 %v218
    %v1592 = vpack.c.b16 %v1588, %v1587
    %v1593 = vpack.c.b16 %v1590, %v1589
    %v1594 = vpack.c.b16 %v1591, %v1591
    %v1598 = vsel %vm380, %v1594, 0
    %1600 = vmatpush.bf16.msra.mxu0 0
    %1601 = vmatpush.bf16.msra.mxu0 0
    %1602 = vmatpush.bf16.msra.mxu0 0
    %1603 = vmatpush.bf16.msra.mxu0 0
    %1604 = vmatpush.bf16.msra.mxu0 0
    %1605 = vmatpush.bf16.msra.mxu0 %v1598
    %1606 = vmatpush.bf16.msra.mxu0 %v1593
    %1607 = vmatpush.bf16.msra.mxu0 %v1592
    %1608 = vmatmul.bf16.gmra.mxu0 %v378
    %v1609 = vpop.f32.mrf.mxu0
    %v1610 = vadd.f32 %v349, %v1609
    %v1611 = vpop.f32.mrf.mxu0
    %v1612 = vadd.f32 %v354, %v1611
    %1613 = vdwg.mxu0
    %v1619 = vunpack.c.l.b16 %v219
    %v1620 = vunpack.c.l.b16 %v220
    %v1621 = vunpack.c.l.b16 %v221
    %v1622 = vunpack.c.l.b16 %v222
    %v1623 = vunpack.c.l.b16 %v223
    %v1624 = vpack.c.b16 %v1620, %v1619
    %v1625 = vpack.c.b16 %v1622, %v1621
    %v1626 = vpack.c.b16 %v1623, %v1623
    %v1630 = vsel %vm380, %v1626, 0
    %1632 = vmatpush.bf16.msra.mxu0 0
    %1633 = vmatpush.bf16.msra.mxu0 0
    %1634 = vmatpush.bf16.msra.mxu0 0
    %1635 = vmatpush.bf16.msra.mxu0 0
    %1636 = vmatpush.bf16.msra.mxu0 0
    %1637 = vmatpush.bf16.msra.mxu0 %v1630
    %1638 = vmatpush.bf16.msra.mxu0 %v1625
    %1639 = vmatpush.bf16.msra.mxu0 %v1624
    %1640 = vmatmul.bf16.gmra.mxu0 %v378
    %v1641 = vpop.f32.mrf.mxu0
    %v1642 = vadd.f32 %v349, %v1641
    %v1643 = vpop.f32.mrf.mxu0
    %v1644 = vadd.f32 %v354, %v1643
    %1645 = vdwg.mxu0
    %v1651 = vunpack.c.l.b16 %v224
    %v1652 = vunpack.c.l.b16 %v225
    %v1653 = vunpack.c.l.b16 %v226
    %v1654 = vunpack.c.l.b16 %v227
    %v1655 = vunpack.c.l.b16 %v228
    %v1656 = vpack.c.b16 %v1652, %v1651
    %v1657 = vpack.c.b16 %v1654, %v1653
    %v1658 = vpack.c.b16 %v1655, %v1655
    %v1662 = vsel %vm380, %v1658, 0
    %1664 = vmatpush.bf16.msra.mxu0 0
    %1665 = vmatpush.bf16.msra.mxu0 0
    %1666 = vmatpush.bf16.msra.mxu0 0
    %1667 = vmatpush.bf16.msra.mxu0 0
    %1668 = vmatpush.bf16.msra.mxu0 0
    %1669 = vmatpush.bf16.msra.mxu0 %v1662
    %1670 = vmatpush.bf16.msra.mxu0 %v1657
    %1671 = vmatpush.bf16.msra.mxu0 %v1656
    %1672 = vmatmul.bf16.gmra.mxu0 %v378
    %v1673 = vpop.f32.mrf.mxu0
    %v1674 = vadd.f32 %v349, %v1673
    %v1675 = vpop.f32.mrf.mxu0
    %v1676 = vadd.f32 %v354, %v1675
    %1677 = vdwg.mxu0
    %v1683 = vunpack.c.l.b16 %v229
    %v1684 = vunpack.c.l.b16 %v230
    %v1685 = vunpack.c.l.b16 %v231
    %v1686 = vunpack.c.l.b16 %v232
    %v1687 = vunpack.c.l.b16 %v233
    %v1688 = vpack.c.b16 %v1684, %v1683
    %v1689 = vpack.c.b16 %v1686, %v1685
    %v1690 = vpack.c.b16 %v1687, %v1687
    %v1694 = vsel %vm380, %v1690, 0
    %1696 = vmatpush.bf16.msra.mxu0 0
    %1697 = vmatpush.bf16.msra.mxu0 0
    %1698 = vmatpush.bf16.msra.mxu0 0
    %1699 = vmatpush.bf16.msra.mxu0 0
    %1700 = vmatpush.bf16.msra.mxu0 0
    %1701 = vmatpush.bf16.msra.mxu0 %v1694
    %1702 = vmatpush.bf16.msra.mxu0 %v1689
    %1703 = vmatpush.bf16.msra.mxu0 %v1688
    %1704 = vmatmul.bf16.gmra.mxu0 %v378
    %v1705 = vpop.f32.mrf.mxu0
    %v1706 = vadd.f32 %v349, %v1705
    %v1707 = vpop.f32.mrf.mxu0
    %v1708 = vadd.f32 %v354, %v1707
    %1709 = vdwg.mxu0
    %v1715 = vunpack.c.l.b16 %v234
    %v1716 = vunpack.c.l.b16 %v235
    %v1717 = vunpack.c.l.b16 %v236
    %v1718 = vunpack.c.l.b16 %v237
    %v1719 = vunpack.c.l.b16 %v238
    %v1720 = vpack.c.b16 %v1716, %v1715
    %v1721 = vpack.c.b16 %v1718, %v1717
    %v1722 = vpack.c.b16 %v1719, %v1719
    %v1726 = vsel %vm380, %v1722, 0
    %1728 = vmatpush.bf16.msra.mxu0 0
    %1729 = vmatpush.bf16.msra.mxu0 0
    %1730 = vmatpush.bf16.msra.mxu0 0
    %1731 = vmatpush.bf16.msra.mxu0 0
    %1732 = vmatpush.bf16.msra.mxu0 0
    %1733 = vmatpush.bf16.msra.mxu0 %v1726
    %1734 = vmatpush.bf16.msra.mxu0 %v1721
    %1735 = vmatpush.bf16.msra.mxu0 %v1720
    %1736 = vmatmul.bf16.gmra.mxu0 %v378
    %v1737 = vpop.f32.mrf.mxu0
    %v1738 = vadd.f32 %v349, %v1737
    %v1739 = vpop.f32.mrf.mxu0
    %v1740 = vadd.f32 %v354, %v1739
    %1741 = vdwg.mxu0
    %v1747 = vunpack.c.l.b16 %v239
    %v1748 = vunpack.c.l.b16 %v240
    %v1749 = vunpack.c.l.b16 %v241
    %v1750 = vunpack.c.l.b16 %v242
    %v1751 = vunpack.c.l.b16 %v243
    %v1752 = vpack.c.b16 %v1748, %v1747
    %v1753 = vpack.c.b16 %v1750, %v1749
    %v1754 = vpack.c.b16 %v1751, %v1751
    %v1758 = vsel %vm380, %v1754, 0
    %1760 = vmatpush.bf16.msra.mxu0 0
    %1761 = vmatpush.bf16.msra.mxu0 0
    %1762 = vmatpush.bf16.msra.mxu0 0
    %1763 = vmatpush.bf16.msra.mxu0 0
    %1764 = vmatpush.bf16.msra.mxu0 0
    %1765 = vmatpush.bf16.msra.mxu0 %v1758
    %1766 = vmatpush.bf16.msra.mxu0 %v1753
    %1767 = vmatpush.bf16.msra.mxu0 %v1752
    %1768 = vmatmul.bf16.gmra.mxu0 %v378
    %v1769 = vpop.f32.mrf.mxu0
    %v1770 = vadd.f32 %v349, %v1769
    %v1771 = vpop.f32.mrf.mxu0
    %v1772 = vadd.f32 %v354, %v1771
    %1773 = vdwg.mxu0
    %v1779 = vunpack.c.l.b16 %v244
    %v1780 = vunpack.c.l.b16 %v245
    %v1781 = vunpack.c.l.b16 %v246
    %v1782 = vunpack.c.l.b16 %v247
    %v1783 = vunpack.c.l.b16 %v248
    %v1784 = vpack.c.b16 %v1780, %v1779
    %v1785 = vpack.c.b16 %v1782, %v1781
    %v1786 = vpack.c.b16 %v1783, %v1783
    %v1790 = vsel %vm380, %v1786, 0
    %1792 = vmatpush.bf16.msra.mxu0 0
    %1793 = vmatpush.bf16.msra.mxu0 0
    %1794 = vmatpush.bf16.msra.mxu0 0
    %1795 = vmatpush.bf16.msra.mxu0 0
    %1796 = vmatpush.bf16.msra.mxu0 0
    %1797 = vmatpush.bf16.msra.mxu0 %v1790
    %1798 = vmatpush.bf16.msra.mxu0 %v1785
    %1799 = vmatpush.bf16.msra.mxu0 %v1784
    %1800 = vmatmul.bf16.gmra.mxu0 %v378
    %v1801 = vpop.f32.mrf.mxu0
    %v1802 = vadd.f32 %v349, %v1801
    %v1803 = vpop.f32.mrf.mxu0
    %v1804 = vadd.f32 %v354, %v1803
    %1805 = vdwg.mxu0
    %v1811 = vunpack.c.l.b16 %v249
    %v1812 = vunpack.c.l.b16 %v250
    %v1813 = vunpack.c.l.b16 %v251
    %v1814 = vunpack.c.l.b16 %v252
    %v1815 = vunpack.c.l.b16 %v253
    %v1816 = vpack.c.b16 %v1812, %v1811
    %v1817 = vpack.c.b16 %v1814, %v1813
    %v1818 = vpack.c.b16 %v1815, %v1815
    %v1822 = vsel %vm380, %v1818, 0
    %1824 = vmatpush.bf16.msra.mxu0 0
    %1825 = vmatpush.bf16.msra.mxu0 0
    %1826 = vmatpush.bf16.msra.mxu0 0
    %1827 = vmatpush.bf16.msra.mxu0 0
    %1828 = vmatpush.bf16.msra.mxu0 0
    %1829 = vmatpush.bf16.msra.mxu0 %v1822
    %1830 = vmatpush.bf16.msra.mxu0 %v1817
    %1831 = vmatpush.bf16.msra.mxu0 %v1816
    %1832 = vmatmul.bf16.gmra.mxu0 %v378
    %v1833 = vpop.f32.mrf.mxu0
    %v1834 = vadd.f32 %v349, %v1833
    %v1835 = vpop.f32.mrf.mxu0
    %v1836 = vadd.f32 %v354, %v1835
    %1837 = vdwg.mxu0
    %v1843 = vunpack.c.l.b16 %v254
    %v1844 = vunpack.c.l.b16 %v255
    %v1845 = vunpack.c.l.b16 %v256
    %v1846 = vunpack.c.l.b16 %v257
    %v1847 = vunpack.c.l.b16 %v258
    %v1848 = vpack.c.b16 %v1844, %v1843
    %v1849 = vpack.c.b16 %v1846, %v1845
    %v1850 = vpack.c.b16 %v1847, %v1847
    %v1854 = vsel %vm380, %v1850, 0
    %1856 = vmatpush.bf16.msra.mxu0 0
    %1857 = vmatpush.bf16.msra.mxu0 0
    %1858 = vmatpush.bf16.msra.mxu0 0
    %1859 = vmatpush.bf16.msra.mxu0 0
    %1860 = vmatpush.bf16.msra.mxu0 0
    %1861 = vmatpush.bf16.msra.mxu0 %v1854
    %1862 = vmatpush.bf16.msra.mxu0 %v1849
    %1863 = vmatpush.bf16.msra.mxu0 %v1848
    %1864 = vmatmul.bf16.gmra.mxu0 %v378
    %v1865 = vpop.f32.mrf.mxu0
    %v1866 = vadd.f32 %v349, %v1865
    %v1867 = vpop.f32.mrf.mxu0
    %v1868 = vadd.f32 %v354, %v1867
    %1869 = vdwg.mxu0
    %v1875 = vunpack.c.l.b16 %v259
    %v1876 = vunpack.c.l.b16 %v260
    %v1877 = vunpack.c.l.b16 %v261
    %v1878 = vunpack.c.l.b16 %v262
    %v1879 = vunpack.c.l.b16 %v263
    %v1880 = vpack.c.b16 %v1876, %v1875
    %v1881 = vpack.c.b16 %v1878, %v1877
    %v1882 = vpack.c.b16 %v1879, %v1879
    %v1886 = vsel %vm380, %v1882, 0
    %1888 = vmatpush.bf16.msra.mxu0 0
    %1889 = vmatpush.bf16.msra.mxu0 0
    %1890 = vmatpush.bf16.msra.mxu0 0
    %1891 = vmatpush.bf16.msra.mxu0 0
    %1892 = vmatpush.bf16.msra.mxu0 0
    %1893 = vmatpush.bf16.msra.mxu0 %v1886
    %1894 = vmatpush.bf16.msra.mxu0 %v1881
    %1895 = vmatpush.bf16.msra.mxu0 %v1880
    %1896 = vmatmul.bf16.gmra.mxu0 %v378
    %v1897 = vpop.f32.mrf.mxu0
    %v1898 = vadd.f32 %v349, %v1897
    %v1899 = vpop.f32.mrf.mxu0
    %v1900 = vadd.f32 %v354, %v1899
    %1901 = vdwg.mxu0
    %v1907 = vunpack.c.l.b16 %v264
    %v1908 = vunpack.c.l.b16 %v265
    %v1909 = vunpack.c.l.b16 %v266
    %v1910 = vunpack.c.l.b16 %v267
    %v1911 = vunpack.c.l.b16 %v268
    %v1912 = vpack.c.b16 %v1908, %v1907
    %v1913 = vpack.c.b16 %v1910, %v1909
    %v1914 = vpack.c.b16 %v1911, %v1911
    %v1918 = vsel %vm380, %v1914, 0
    %1920 = vmatpush.bf16.msra.mxu0 0
    %1921 = vmatpush.bf16.msra.mxu0 0
    %1922 = vmatpush.bf16.msra.mxu0 0
    %1923 = vmatpush.bf16.msra.mxu0 0
    %1924 = vmatpush.bf16.msra.mxu0 0
    %1925 = vmatpush.bf16.msra.mxu0 %v1918
    %1926 = vmatpush.bf16.msra.mxu0 %v1913
    %1927 = vmatpush.bf16.msra.mxu0 %v1912
    %1928 = vmatmul.bf16.gmra.mxu0 %v378
    %v1929 = vpop.f32.mrf.mxu0
    %v1930 = vadd.f32 %v349, %v1929
    %v1931 = vpop.f32.mrf.mxu0
    %v1932 = vadd.f32 %v354, %v1931
    %1933 = vdwg.mxu0
    %v1939 = vunpack.c.l.b16 %v269
    %v1940 = vunpack.c.l.b16 %v270
    %v1941 = vunpack.c.l.b16 %v271
    %v1942 = vunpack.c.l.b16 %v272
    %v1943 = vunpack.c.l.b16 %v273
    %v1944 = vpack.c.b16 %v1940, %v1939
    %v1945 = vpack.c.b16 %v1942, %v1941
    %v1946 = vpack.c.b16 %v1943, %v1943
    %v1950 = vsel %vm380, %v1946, 0
    %1952 = vmatpush.bf16.msra.mxu0 0
    %1953 = vmatpush.bf16.msra.mxu0 0
    %1954 = vmatpush.bf16.msra.mxu0 0
    %1955 = vmatpush.bf16.msra.mxu0 0
    %1956 = vmatpush.bf16.msra.mxu0 0
    %1957 = vmatpush.bf16.msra.mxu0 %v1950
    %1958 = vmatpush.bf16.msra.mxu0 %v1945
    %1959 = vmatpush.bf16.msra.mxu0 %v1944
    %1960 = vmatmul.bf16.gmra.mxu0 %v378
    %v1961 = vpop.f32.mrf.mxu0
    %v1962 = vadd.f32 %v349, %v1961
    %v1963 = vpop.f32.mrf.mxu0
    %v1964 = vadd.f32 %v354, %v1963
    %1965 = vdwg.mxu0
    %v1971 = vunpack.c.l.b16 %v274
    %v1972 = vunpack.c.l.b16 %v275
    %v1973 = vunpack.c.l.b16 %v276
    %v1974 = vunpack.c.l.b16 %v277
    %v1975 = vunpack.c.l.b16 %v278
    %v1976 = vpack.c.b16 %v1972, %v1971
    %v1977 = vpack.c.b16 %v1974, %v1973
    %v1978 = vpack.c.b16 %v1975, %v1975
    %v1982 = vsel %vm380, %v1978, 0
    %1984 = vmatpush.bf16.msra.mxu0 0
    %1985 = vmatpush.bf16.msra.mxu0 0
    %1986 = vmatpush.bf16.msra.mxu0 0
    %1987 = vmatpush.bf16.msra.mxu0 0
    %1988 = vmatpush.bf16.msra.mxu0 0
    %1989 = vmatpush.bf16.msra.mxu0 %v1982
    %1990 = vmatpush.bf16.msra.mxu0 %v1977
    %1991 = vmatpush.bf16.msra.mxu0 %v1976
    %1992 = vmatmul.bf16.gmra.mxu0 %v378
    %v1993 = vpop.f32.mrf.mxu0
    %v1994 = vadd.f32 %v349, %v1993
    %v1995 = vpop.f32.mrf.mxu0
    %v1996 = vadd.f32 %v354, %v1995
    %1997 = vdwg.mxu0
    %v2003 = vunpack.c.l.b16 %v279
    %v2004 = vunpack.c.l.b16 %v280
    %v2005 = vunpack.c.l.b16 %v281
    %v2006 = vunpack.c.l.b16 %v282
    %v2007 = vunpack.c.l.b16 %v283
    %v2008 = vpack.c.b16 %v2004, %v2003
    %v2009 = vpack.c.b16 %v2006, %v2005
    %v2010 = vpack.c.b16 %v2007, %v2007
    %v2014 = vsel %vm380, %v2010, 0
    %2016 = vmatpush.bf16.msra.mxu0 0
    %2017 = vmatpush.bf16.msra.mxu0 0
    %2018 = vmatpush.bf16.msra.mxu0 0
    %2019 = vmatpush.bf16.msra.mxu0 0
    %2020 = vmatpush.bf16.msra.mxu0 0
    %2021 = vmatpush.bf16.msra.mxu0 %v2014
    %2022 = vmatpush.bf16.msra.mxu0 %v2009
    %2023 = vmatpush.bf16.msra.mxu0 %v2008
    %2024 = vmatmul.bf16.gmra.mxu0 %v378
    %v2025 = vpop.f32.mrf.mxu0
    %v2026 = vadd.f32 %v349, %v2025
    %v2027 = vpop.f32.mrf.mxu0
    %v2028 = vadd.f32 %v354, %v2027
    %2029 = vdwg.mxu0
    %v2035 = vunpack.c.l.b16 %v284
    %v2036 = vunpack.c.l.b16 %v285
    %v2037 = vunpack.c.l.b16 %v286
    %v2038 = vunpack.c.l.b16 %v287
    %v2039 = vunpack.c.l.b16 %v288
    %v2040 = vpack.c.b16 %v2036, %v2035
    %v2041 = vpack.c.b16 %v2038, %v2037
    %v2042 = vpack.c.b16 %v2039, %v2039
    %v2046 = vsel %vm380, %v2042, 0
    %2048 = vmatpush.bf16.msra.mxu0 0
    %2049 = vmatpush.bf16.msra.mxu0 0
    %2050 = vmatpush.bf16.msra.mxu0 0
    %2051 = vmatpush.bf16.msra.mxu0 0
    %2052 = vmatpush.bf16.msra.mxu0 0
    %2053 = vmatpush.bf16.msra.mxu0 %v2046
    %2054 = vmatpush.bf16.msra.mxu0 %v2041
    %2055 = vmatpush.bf16.msra.mxu0 %v2040
    %2056 = vmatmul.bf16.gmra.mxu0 %v378
    %v2057 = vpop.f32.mrf.mxu0
    %v2058 = vadd.f32 %v349, %v2057
    %v2059 = vpop.f32.mrf.mxu0
    %v2060 = vadd.f32 %v354, %v2059
    %2061 = vdwg.mxu0
    %v2067 = vunpack.c.l.b16 %v289
    %v2068 = vunpack.c.l.b16 %v290
    %v2069 = vunpack.c.l.b16 %v291
    %v2070 = vunpack.c.l.b16 %v292
    %v2071 = vunpack.c.l.b16 %v293
    %v2072 = vpack.c.b16 %v2068, %v2067
    %v2073 = vpack.c.b16 %v2070, %v2069
    %v2074 = vpack.c.b16 %v2071, %v2071
    %v2078 = vsel %vm380, %v2074, 0
    %2080 = vmatpush.bf16.msra.mxu0 0
    %2081 = vmatpush.bf16.msra.mxu0 0
    %2082 = vmatpush.bf16.msra.mxu0 0
    %2083 = vmatpush.bf16.msra.mxu0 0
    %2084 = vmatpush.bf16.msra.mxu0 0
    %2085 = vmatpush.bf16.msra.mxu0 %v2078
    %2086 = vmatpush.bf16.msra.mxu0 %v2073
    %2087 = vmatpush.bf16.msra.mxu0 %v2072
    %2088 = vmatmul.bf16.gmra.mxu0 %v378
    %v2089 = vpop.f32.mrf.mxu0
    %v2090 = vadd.f32 %v349, %v2089
    %v2091 = vpop.f32.mrf.mxu0
    %v2092 = vadd.f32 %v354, %v2091
    %2093 = vdwg.mxu0
    %v2099 = vunpack.c.l.b16 %v294
    %v2100 = vunpack.c.l.b16 %v295
    %v2101 = vunpack.c.l.b16 %v296
    %v2102 = vunpack.c.l.b16 %v297
    %v2103 = vunpack.c.l.b16 %v298
    %v2104 = vpack.c.b16 %v2100, %v2099
    %v2105 = vpack.c.b16 %v2102, %v2101
    %v2106 = vpack.c.b16 %v2103, %v2103
    %v2110 = vsel %vm380, %v2106, 0
    %2112 = vmatpush.bf16.msra.mxu0 0
    %2113 = vmatpush.bf16.msra.mxu0 0
    %2114 = vmatpush.bf16.msra.mxu0 0
    %2115 = vmatpush.bf16.msra.mxu0 0
    %2116 = vmatpush.bf16.msra.mxu0 0
    %2117 = vmatpush.bf16.msra.mxu0 %v2110
    %2118 = vmatpush.bf16.msra.mxu0 %v2105
    %2119 = vmatpush.bf16.msra.mxu0 %v2104
    %2120 = vmatmul.bf16.gmra.mxu0 %v378
    %v2121 = vpop.f32.mrf.mxu0
    %v2122 = vadd.f32 %v349, %v2121
    %v2123 = vpop.f32.mrf.mxu0
    %v2124 = vadd.f32 %v354, %v2123
    %2125 = vdwg.mxu0
    %v2131 = vunpack.c.l.b16 %v299
    %v2132 = vunpack.c.l.b16 %v300
    %v2133 = vunpack.c.l.b16 %v301
    %v2134 = vunpack.c.l.b16 %v302
    %v2135 = vunpack.c.l.b16 %v303
    %v2136 = vpack.c.b16 %v2132, %v2131
    %v2137 = vpack.c.b16 %v2134, %v2133
    %v2138 = vpack.c.b16 %v2135, %v2135
    %v2142 = vsel %vm380, %v2138, 0
    %2144 = vmatpush.bf16.msra.mxu0 0
    %2145 = vmatpush.bf16.msra.mxu0 0
    %2146 = vmatpush.bf16.msra.mxu0 0
    %2147 = vmatpush.bf16.msra.mxu0 0
    %2148 = vmatpush.bf16.msra.mxu0 0
    %2149 = vmatpush.bf16.msra.mxu0 %v2142
    %2150 = vmatpush.bf16.msra.mxu0 %v2137
    %2151 = vmatpush.bf16.msra.mxu0 %v2136
    %2152 = vmatmul.bf16.gmra.mxu0 %v378
    %v2153 = vpop.f32.mrf.mxu0
    %v2154 = vadd.f32 %v349, %v2153
    %v2155 = vpop.f32.mrf.mxu0
    %v2156 = vadd.f32 %v354, %v2155
    %2157 = vdwg.mxu0
    %v2163 = vunpack.c.l.b16 %v304
    %v2164 = vunpack.c.l.b16 %v305
    %v2165 = vunpack.c.l.b16 %v306
    %v2166 = vunpack.c.l.b16 %v307
    %v2167 = vunpack.c.l.b16 %v308
    %v2168 = vpack.c.b16 %v2164, %v2163
    %v2169 = vpack.c.b16 %v2166, %v2165
    %v2170 = vpack.c.b16 %v2167, %v2167
    %v2174 = vsel %vm380, %v2170, 0
    %2176 = vmatpush.bf16.msra.mxu0 0
    %2177 = vmatpush.bf16.msra.mxu0 0
    %2178 = vmatpush.bf16.msra.mxu0 0
    %2179 = vmatpush.bf16.msra.mxu0 0
    %2180 = vmatpush.bf16.msra.mxu0 0
    %2181 = vmatpush.bf16.msra.mxu0 %v2174
    %2182 = vmatpush.bf16.msra.mxu0 %v2169
    %2183 = vmatpush.bf16.msra.mxu0 %v2168
    %2184 = vmatmul.bf16.gmra.mxu0 %v378
    %v2185 = vpop.f32.mrf.mxu0
    %v2186 = vadd.f32 %v349, %v2185
    %v2187 = vpop.f32.mrf.mxu0
    %v2188 = vadd.f32 %v354, %v2187
    %2189 = vdwg.mxu0
    %v2195 = vunpack.c.l.b16 %v309
    %v2196 = vunpack.c.l.b16 %v310
    %v2197 = vunpack.c.l.b16 %v311
    %v2198 = vunpack.c.l.b16 %v312
    %v2199 = vunpack.c.l.b16 %v313
    %v2200 = vpack.c.b16 %v2196, %v2195
    %v2201 = vpack.c.b16 %v2198, %v2197
    %v2202 = vpack.c.b16 %v2199, %v2199
    %v2206 = vsel %vm380, %v2202, 0
    %2208 = vmatpush.bf16.msra.mxu0 0
    %2209 = vmatpush.bf16.msra.mxu0 0
    %2210 = vmatpush.bf16.msra.mxu0 0
    %2211 = vmatpush.bf16.msra.mxu0 0
    %2212 = vmatpush.bf16.msra.mxu0 0
    %2213 = vmatpush.bf16.msra.mxu0 %v2206
    %2214 = vmatpush.bf16.msra.mxu0 %v2201
    %2215 = vmatpush.bf16.msra.mxu0 %v2200
    %2216 = vmatmul.bf16.gmra.mxu0 %v378
    %v2217 = vpop.f32.mrf.mxu0
    %v2218 = vadd.f32 %v349, %v2217
    %v2219 = vpop.f32.mrf.mxu0
    %v2220 = vadd.f32 %v354, %v2219
    %2221 = vdwg.mxu0
    %v2227 = vunpack.c.l.b16 %v314
    %v2228 = vunpack.c.l.b16 %v315
    %v2229 = vunpack.c.l.b16 %v316
    %v2230 = vunpack.c.l.b16 %v317
    %v2231 = vunpack.c.l.b16 %v318
    %v2232 = vpack.c.b16 %v2228, %v2227
    %v2233 = vpack.c.b16 %v2230, %v2229
    %v2234 = vpack.c.b16 %v2231, %v2231
    %v2238 = vsel %vm380, %v2234, 0
    %2240 = vmatpush.bf16.msra.mxu0 0
    %2241 = vmatpush.bf16.msra.mxu0 0
    %2242 = vmatpush.bf16.msra.mxu0 0
    %2243 = vmatpush.bf16.msra.mxu0 0
    %2244 = vmatpush.bf16.msra.mxu0 0
    %2245 = vmatpush.bf16.msra.mxu0 %v2238
    %2246 = vmatpush.bf16.msra.mxu0 %v2233
    %2247 = vmatpush.bf16.msra.mxu0 %v2232
    %2248 = vmatmul.bf16.gmra.mxu0 %v378
    %v2249 = vpop.f32.mrf.mxu0
    %v2250 = vadd.f32 %v349, %v2249
    %v2251 = vpop.f32.mrf.mxu0
    %v2252 = vadd.f32 %v354, %v2251
    %2253 = vdwg.mxu0
    %v2259 = vunpack.c.l.b16 %v319
    %v2260 = vunpack.c.l.b16 %v320
    %v2261 = vunpack.c.l.b16 %v321
    %v2262 = vunpack.c.l.b16 %v322
    %v2263 = vunpack.c.l.b16 %v323
    %v2264 = vpack.c.b16 %v2260, %v2259
    %v2265 = vpack.c.b16 %v2262, %v2261
    %v2266 = vpack.c.b16 %v2263, %v2263
    %v2270 = vsel %vm380, %v2266, 0
    %2272 = vmatpush.bf16.msra.mxu0 0
    %2273 = vmatpush.bf16.msra.mxu0 0
    %2274 = vmatpush.bf16.msra.mxu0 0
    %2275 = vmatpush.bf16.msra.mxu0 0
    %2276 = vmatpush.bf16.msra.mxu0 0
    %2277 = vmatpush.bf16.msra.mxu0 %v2270
    %2278 = vmatpush.bf16.msra.mxu0 %v2265
    %2279 = vmatpush.bf16.msra.mxu0 %v2264
    %2280 = vmatmul.bf16.gmra.mxu0 %v378
    %v2281 = vpop.f32.mrf.mxu0
    %v2282 = vadd.f32 %v349, %v2281
    %v2283 = vpop.f32.mrf.mxu0
    %v2284 = vadd.f32 %v354, %v2283
    %2285 = vdwg.mxu0
    %v2291 = vunpack.c.l.b16 %v324
    %v2292 = vunpack.c.l.b16 %v325
    %v2293 = vunpack.c.l.b16 %v326
    %v2294 = vunpack.c.l.b16 %v327
    %v2295 = vunpack.c.l.b16 %v328
    %v2296 = vpack.c.b16 %v2292, %v2291
    %v2297 = vpack.c.b16 %v2294, %v2293
    %v2298 = vpack.c.b16 %v2295, %v2295
    %v2302 = vsel %vm380, %v2298, 0
    %2304 = vmatpush.bf16.msra.mxu0 0
    %2305 = vmatpush.bf16.msra.mxu0 0
    %2306 = vmatpush.bf16.msra.mxu0 0
    %2307 = vmatpush.bf16.msra.mxu0 0
    %2308 = vmatpush.bf16.msra.mxu0 0
    %2309 = vmatpush.bf16.msra.mxu0 %v2302
    %2310 = vmatpush.bf16.msra.mxu0 %v2297
    %2311 = vmatpush.bf16.msra.mxu0 %v2296
    %2312 = vmatmul.bf16.gmra.mxu0 %v378
    %v2313 = vpop.f32.mrf.mxu0
    %v2314 = vadd.f32 %v349, %v2313
    %v2315 = vpop.f32.mrf.mxu0
    %v2316 = vadd.f32 %v354, %v2315
    %2317 = vdwg.mxu0
    %v2323 = vunpack.c.l.b16 %v329
    %v2324 = vunpack.c.l.b16 %v330
    %v2325 = vunpack.c.l.b16 %v331
    %v2326 = vunpack.c.l.b16 %v332
    %v2327 = vunpack.c.l.b16 %v333
    %v2328 = vpack.c.b16 %v2324, %v2323
    %v2329 = vpack.c.b16 %v2326, %v2325
    %v2330 = vpack.c.b16 %v2327, %v2327
    %v2334 = vsel %vm380, %v2330, 0
    %2336 = vmatpush.bf16.msra.mxu0 0
    %2337 = vmatpush.bf16.msra.mxu0 0
    %2338 = vmatpush.bf16.msra.mxu0 0
    %2339 = vmatpush.bf16.msra.mxu0 0
    %2340 = vmatpush.bf16.msra.mxu0 0
    %2341 = vmatpush.bf16.msra.mxu0 %v2334
    %2342 = vmatpush.bf16.msra.mxu0 %v2329
    %2343 = vmatpush.bf16.msra.mxu0 %v2328
    %2344 = vmatmul.bf16.gmra.mxu0 %v378
    %v2345 = vpop.f32.mrf.mxu0
    %v2346 = vadd.f32 %v349, %v2345
    %v2347 = vpop.f32.mrf.mxu0
    %v2348 = vadd.f32 %v354, %v2347
    %2349 = vdwg.mxu0
    %v2355 = vunpack.c.l.b16 %v334
    %v2356 = vunpack.c.l.b16 %v335
    %v2357 = vunpack.c.l.b16 %v336
    %v2358 = vunpack.c.l.b16 %v337
    %v2359 = vunpack.c.l.b16 %v338
    %v2360 = vpack.c.b16 %v2356, %v2355
    %v2361 = vpack.c.b16 %v2358, %v2357
    %v2362 = vpack.c.b16 %v2359, %v2359
    %v2366 = vsel %vm380, %v2362, 0
    %2368 = vmatpush.bf16.msra.mxu0 0
    %2369 = vmatpush.bf16.msra.mxu0 0
    %2370 = vmatpush.bf16.msra.mxu0 0
    %2371 = vmatpush.bf16.msra.mxu0 0
    %2372 = vmatpush.bf16.msra.mxu0 0
    %2373 = vmatpush.bf16.msra.mxu0 %v2366
    %2374 = vmatpush.bf16.msra.mxu0 %v2361
    %2375 = vmatpush.bf16.msra.mxu0 %v2360
    %2376 = vmatmul.bf16.gmra.mxu0 %v378
    %v2377 = vpop.f32.mrf.mxu0
    %v2378 = vadd.f32 %v349, %v2377
    %v2379 = vpop.f32.mrf.mxu0
    %v2380 = vadd.f32 %v354, %v2379
    %2381 = vdwg.mxu0
    %v2387 = vunpack.c.l.b16 %v339
    %v2388 = vunpack.c.l.b16 %v340
    %v2389 = vunpack.c.l.b16 %v341
    %v2390 = vunpack.c.l.b16 %v342
    %v2391 = vunpack.c.l.b16 %v343
    %v2392 = vpack.c.b16 %v2388, %v2387
    %v2393 = vpack.c.b16 %v2390, %v2389
    %v2394 = vpack.c.b16 %v2391, %v2391
    %v2398 = vsel %vm380, %v2394, 0
    %2400 = vmatpush.bf16.msra.mxu0 0
    %2401 = vmatpush.bf16.msra.mxu0 0
    %2402 = vmatpush.bf16.msra.mxu0 0
    %2403 = vmatpush.bf16.msra.mxu0 0
    %2404 = vmatpush.bf16.msra.mxu0 0
    %2405 = vmatpush.bf16.msra.mxu0 %v2398
    %2406 = vmatpush.bf16.msra.mxu0 %v2393
    %2407 = vmatpush.bf16.msra.mxu0 %v2392
    %2408 = vmatmul.bf16.gmra.mxu0 %v378
    %v2409 = vpop.f32.mrf.mxu0
    %v2410 = vadd.f32 %v349, %v2409
    %v2411 = vpop.f32.mrf.mxu0
    %v2412 = vadd.f32 %v354, %v2411
    %2413 = vdwg.mxu0
    %v2414 = vmax.f32 %v394, 0.0
    %v2415 = vmax.f32 %v396, 0.0
    %v2416 = vmax.f32 %v426, 0.0
    %v2417 = vmax.f32 %v428, 0.0
    %v2418 = vmax.f32 %v458, 0.0
    %v2419 = vmax.f32 %v460, 0.0
    %v2420 = vmax.f32 %v490, 0.0
    %v2421 = vmax.f32 %v492, 0.0
    %v2422 = vmax.f32 %v522, 0.0
    %v2423 = vmax.f32 %v524, 0.0
    %v2424 = vmax.f32 %v554, 0.0
    %v2425 = vmax.f32 %v556, 0.0
    %v2426 = vmax.f32 %v586, 0.0
    %v2427 = vmax.f32 %v588, 0.0
    %v2428 = vmax.f32 %v618, 0.0
    %v2429 = vmax.f32 %v620, 0.0
    %v2430 = vmax.f32 %v650, 0.0
    %v2431 = vmax.f32 %v652, 0.0
    %v2432 = vmax.f32 %v682, 0.0
    %v2433 = vmax.f32 %v684, 0.0
    %v2434 = vmax.f32 %v714, 0.0
    %v2435 = vmax.f32 %v716, 0.0
    %v2436 = vmax.f32 %v746, 0.0
    %v2437 = vmax.f32 %v748, 0.0
    %v2438 = vmax.f32 %v778, 0.0
    %v2439 = vmax.f32 %v780, 0.0
    %v2440 = vmax.f32 %v810, 0.0
    %v2441 = vmax.f32 %v812, 0.0
    %v2442 = vmax.f32 %v842, 0.0
    %v2443 = vmax.f32 %v844, 0.0
    %v2444 = vmax.f32 %v874, 0.0
    %v2445 = vmax.f32 %v876, 0.0
    %v2446 = vmax.f32 %v906, 0.0
    %v2447 = vmax.f32 %v908, 0.0
    %v2448 = vmax.f32 %v938, 0.0
    %v2449 = vmax.f32 %v940, 0.0
    %v2450 = vmax.f32 %v970, 0.0
    %v2451 = vmax.f32 %v972, 0.0
    %v2452 = vmax.f32 %v1002, 0.0
    %v2453 = vmax.f32 %v1004, 0.0
    %v2454 = vmax.f32 %v1034, 0.0
    %v2455 = vmax.f32 %v1036, 0.0
    %v2456 = vmax.f32 %v1066, 0.0
    %v2457 = vmax.f32 %v1068, 0.0
    %v2458 = vmax.f32 %v1098, 0.0
    %v2459 = vmax.f32 %v1100, 0.0
    %v2460 = vmax.f32 %v1130, 0.0
    %v2461 = vmax.f32 %v1132, 0.0
    %v2462 = vmax.f32 %v1162, 0.0
    %v2463 = vmax.f32 %v1164, 0.0
    %v2464 = vmax.f32 %v1194, 0.0
    %v2465 = vmax.f32 %v1196, 0.0
    %v2466 = vmax.f32 %v1226, 0.0
    %v2467 = vmax.f32 %v1228, 0.0
    %v2468 = vmax.f32 %v1258, 0.0
    %v2469 = vmax.f32 %v1260, 0.0
    %v2470 = vmax.f32 %v1290, 0.0
    %v2471 = vmax.f32 %v1292, 0.0
    %v2472 = vmax.f32 %v1322, 0.0
    %v2473 = vmax.f32 %v1324, 0.0
    %v2474 = vmax.f32 %v1354, 0.0
    %v2475 = vmax.f32 %v1356, 0.0
    %v2476 = vmax.f32 %v1386, 0.0
    %v2477 = vmax.f32 %v1388, 0.0
    %v2478 = vmax.f32 %v1418, 0.0
    %v2479 = vmax.f32 %v1420, 0.0
    %v2480 = vmax.f32 %v1450, 0.0
    %v2481 = vmax.f32 %v1452, 0.0
    %v2482 = vmax.f32 %v1482, 0.0
    %v2483 = vmax.f32 %v1484, 0.0
    %v2484 = vmax.f32 %v1514, 0.0
    %v2485 = vmax.f32 %v1516, 0.0
    %v2486 = vmax.f32 %v1546, 0.0
    %v2487 = vmax.f32 %v1548, 0.0
    %v2488 = vmax.f32 %v1578, 0.0
    %v2489 = vmax.f32 %v1580, 0.0
    %v2490 = vmax.f32 %v1610, 0.0
    %v2491 = vmax.f32 %v1612, 0.0
    %v2492 = vmax.f32 %v1642, 0.0
    %v2493 = vmax.f32 %v1644, 0.0
    %v2494 = vmax.f32 %v1674, 0.0
    %v2495 = vmax.f32 %v1676, 0.0
    %v2496 = vmax.f32 %v1706, 0.0
    %v2497 = vmax.f32 %v1708, 0.0
    %v2498 = vmax.f32 %v1738, 0.0
    %v2499 = vmax.f32 %v1740, 0.0
    %v2500 = vmax.f32 %v1770, 0.0
    %v2501 = vmax.f32 %v1772, 0.0
    %v2502 = vmax.f32 %v1802, 0.0
    %v2503 = vmax.f32 %v1804, 0.0
    %v2504 = vmax.f32 %v1834, 0.0
    %v2505 = vmax.f32 %v1836, 0.0
    %v2506 = vmax.f32 %v1866, 0.0
    %v2507 = vmax.f32 %v1868, 0.0
    %v2508 = vmax.f32 %v1898, 0.0
    %v2509 = vmax.f32 %v1900, 0.0
    %v2510 = vmax.f32 %v1930, 0.0
    %v2511 = vmax.f32 %v1932, 0.0
    %v2512 = vmax.f32 %v1962, 0.0
    %v2513 = vmax.f32 %v1964, 0.0
    %v2514 = vmax.f32 %v1994, 0.0
    %v2515 = vmax.f32 %v1996, 0.0
    %v2516 = vmax.f32 %v2026, 0.0
    %v2517 = vmax.f32 %v2028, 0.0
    %v2518 = vmax.f32 %v2058, 0.0
    %v2519 = vmax.f32 %v2060, 0.0
    %v2520 = vmax.f32 %v2090, 0.0
    %v2521 = vmax.f32 %v2092, 0.0
    %v2522 = vmax.f32 %v2122, 0.0
    %v2523 = vmax.f32 %v2124, 0.0
    %v2524 = vmax.f32 %v2154, 0.0
    %v2525 = vmax.f32 %v2156, 0.0
    %v2526 = vmax.f32 %v2186, 0.0
    %v2527 = vmax.f32 %v2188, 0.0
    %v2528 = vmax.f32 %v2218, 0.0
    %v2529 = vmax.f32 %v2220, 0.0
    %v2530 = vmax.f32 %v2250, 0.0
    %v2531 = vmax.f32 %v2252, 0.0
    %v2532 = vmax.f32 %v2282, 0.0
    %v2533 = vmax.f32 %v2284, 0.0
    %v2534 = vmax.f32 %v2314, 0.0
    %v2535 = vmax.f32 %v2316, 0.0
    %v2536 = vmax.f32 %v2346, 0.0
    %v2537 = vmax.f32 %v2348, 0.0
    %v2538 = vmax.f32 %v2378, 0.0
    %v2539 = vmax.f32 %v2380, 0.0
    %v2540 = vmax.f32 %v2410, 0.0
    %v2541 = vmax.f32 %v2412, 0.0
    %v2542 = vpack.c.bf16 %v2414, %v2414
    %v2543 = vpack.c.bf16 %v2415, %v2415
    %v2544 = vpack.c.bf16 %v2416, %v2416
    %v2545 = vpack.c.bf16 %v2417, %v2417
    %v2546 = vpack.c.bf16 %v2418, %v2418
    %v2547 = vpack.c.bf16 %v2419, %v2419
    %v2548 = vpack.c.bf16 %v2420, %v2420
    %v2549 = vpack.c.bf16 %v2421, %v2421
    %v2550 = vpack.c.bf16 %v2422, %v2422
    %v2551 = vpack.c.bf16 %v2423, %v2423
    %v2552 = vpack.c.bf16 %v2424, %v2424
    %v2553 = vpack.c.bf16 %v2425, %v2425
    %v2554 = vpack.c.bf16 %v2426, %v2426
    %v2555 = vpack.c.bf16 %v2427, %v2427
    %v2556 = vpack.c.bf16 %v2428, %v2428
    %v2557 = vpack.c.bf16 %v2429, %v2429
    %v2558 = vpack.c.bf16 %v2430, %v2430
    %v2559 = vpack.c.bf16 %v2431, %v2431
    %v2560 = vpack.c.bf16 %v2432, %v2432
    %v2561 = vpack.c.bf16 %v2433, %v2433
    %v2562 = vpack.c.bf16 %v2434, %v2434
    %v2563 = vpack.c.bf16 %v2435, %v2435
    %v2564 = vpack.c.bf16 %v2436, %v2436
    %v2565 = vpack.c.bf16 %v2437, %v2437
    %v2566 = vpack.c.bf16 %v2438, %v2438
    %v2567 = vpack.c.bf16 %v2439, %v2439
    %v2568 = vpack.c.bf16 %v2440, %v2440
    %v2569 = vpack.c.bf16 %v2441, %v2441
    %v2570 = vpack.c.bf16 %v2442, %v2442
    %v2571 = vpack.c.bf16 %v2443, %v2443
    %v2572 = vpack.c.bf16 %v2444, %v2444
    %v2573 = vpack.c.bf16 %v2445, %v2445
    %v2574 = vpack.c.bf16 %v2446, %v2446
    %v2575 = vpack.c.bf16 %v2447, %v2447
    %v2576 = vpack.c.bf16 %v2448, %v2448
    %v2577 = vpack.c.bf16 %v2449, %v2449
    %v2578 = vpack.c.bf16 %v2450, %v2450
    %v2579 = vpack.c.bf16 %v2451, %v2451
    %v2580 = vpack.c.bf16 %v2452, %v2452
    %v2581 = vpack.c.bf16 %v2453, %v2453
    %v2582 = vpack.c.bf16 %v2454, %v2454
    %v2583 = vpack.c.bf16 %v2455, %v2455
    %v2584 = vpack.c.bf16 %v2456, %v2456
    %v2585 = vpack.c.bf16 %v2457, %v2457
    %v2586 = vpack.c.bf16 %v2458, %v2458
    %v2587 = vpack.c.bf16 %v2459, %v2459
    %v2588 = vpack.c.bf16 %v2460, %v2460
    %v2589 = vpack.c.bf16 %v2461, %v2461
    %v2590 = vpack.c.bf16 %v2462, %v2462
    %v2591 = vpack.c.bf16 %v2463, %v2463
    %v2592 = vpack.c.bf16 %v2464, %v2464
    %v2593 = vpack.c.bf16 %v2465, %v2465
    %v2594 = vpack.c.bf16 %v2466, %v2466
    %v2595 = vpack.c.bf16 %v2467, %v2467
    %v2596 = vpack.c.bf16 %v2468, %v2468
    %v2597 = vpack.c.bf16 %v2469, %v2469
    %v2598 = vpack.c.bf16 %v2470, %v2470
    %v2599 = vpack.c.bf16 %v2471, %v2471
    %v2600 = vpack.c.bf16 %v2472, %v2472
    %v2601 = vpack.c.bf16 %v2473, %v2473
    %v2602 = vpack.c.bf16 %v2474, %v2474
    %v2603 = vpack.c.bf16 %v2475, %v2475
    %v2604 = vpack.c.bf16 %v2476, %v2476
    %v2605 = vpack.c.bf16 %v2477, %v2477
    %v2606 = vpack.c.bf16 %v2478, %v2478
    %v2607 = vpack.c.bf16 %v2479, %v2479
    %v2608 = vpack.c.bf16 %v2480, %v2480
    %v2609 = vpack.c.bf16 %v2481, %v2481
    %v2610 = vpack.c.bf16 %v2482, %v2482
    %v2611 = vpack.c.bf16 %v2483, %v2483
    %v2612 = vpack.c.bf16 %v2484, %v2484
    %v2613 = vpack.c.bf16 %v2485, %v2485
    %v2614 = vpack.c.bf16 %v2486, %v2486
    %v2615 = vpack.c.bf16 %v2487, %v2487
    %v2616 = vpack.c.bf16 %v2488, %v2488
    %v2617 = vpack.c.bf16 %v2489, %v2489
    %v2618 = vpack.c.bf16 %v2490, %v2490
    %v2619 = vpack.c.bf16 %v2491, %v2491
    %v2620 = vpack.c.bf16 %v2492, %v2492
    %v2621 = vpack.c.bf16 %v2493, %v2493
    %v2622 = vpack.c.bf16 %v2494, %v2494
    %v2623 = vpack.c.bf16 %v2495, %v2495
    %v2624 = vpack.c.bf16 %v2496, %v2496
    %v2625 = vpack.c.bf16 %v2497, %v2497
    %v2626 = vpack.c.bf16 %v2498, %v2498
    %v2627 = vpack.c.bf16 %v2499, %v2499
    %v2628 = vpack.c.bf16 %v2500, %v2500
    %v2629 = vpack.c.bf16 %v2501, %v2501
    %v2630 = vpack.c.bf16 %v2502, %v2502
    %v2631 = vpack.c.bf16 %v2503, %v2503
    %v2632 = vpack.c.bf16 %v2504, %v2504
    %v2633 = vpack.c.bf16 %v2505, %v2505
    %v2634 = vpack.c.bf16 %v2506, %v2506
    %v2635 = vpack.c.bf16 %v2507, %v2507
    %v2636 = vpack.c.bf16 %v2508, %v2508
    %v2637 = vpack.c.bf16 %v2509, %v2509
    %v2638 = vpack.c.bf16 %v2510, %v2510
    %v2639 = vpack.c.bf16 %v2511, %v2511
    %v2640 = vpack.c.bf16 %v2512, %v2512
    %v2641 = vpack.c.bf16 %v2513, %v2513
    %v2642 = vpack.c.bf16 %v2514, %v2514
    %v2643 = vpack.c.bf16 %v2515, %v2515
    %v2644 = vpack.c.bf16 %v2516, %v2516
    %v2645 = vpack.c.bf16 %v2517, %v2517
    %v2646 = vpack.c.bf16 %v2518, %v2518
    %v2647 = vpack.c.bf16 %v2519, %v2519
    %v2648 = vpack.c.bf16 %v2520, %v2520
    %v2649 = vpack.c.bf16 %v2521, %v2521
    %v2650 = vpack.c.bf16 %v2522, %v2522
    %v2651 = vpack.c.bf16 %v2523, %v2523
    %v2652 = vpack.c.bf16 %v2524, %v2524
    %v2653 = vpack.c.bf16 %v2525, %v2525
    %v2654 = vpack.c.bf16 %v2526, %v2526
    %v2655 = vpack.c.bf16 %v2527, %v2527
    %v2656 = vpack.c.bf16 %v2528, %v2528
    %v2657 = vpack.c.bf16 %v2529, %v2529
    %v2658 = vpack.c.bf16 %v2530, %v2530
    %v2659 = vpack.c.bf16 %v2531, %v2531
    %v2660 = vpack.c.bf16 %v2532, %v2532
    %v2661 = vpack.c.bf16 %v2533, %v2533
    %v2662 = vpack.c.bf16 %v2534, %v2534
    %v2663 = vpack.c.bf16 %v2535, %v2535
    %v2664 = vpack.c.bf16 %v2536, %v2536
    %v2665 = vpack.c.bf16 %v2537, %v2537
    %v2666 = vpack.c.bf16 %v2538, %v2538
    %v2667 = vpack.c.bf16 %v2539, %v2539
    %v2668 = vpack.c.bf16 %v2540, %v2540
    %v2669 = vpack.c.bf16 %v2541, %v2541
    %v2670 = vld [vmem:[%s3] sm:$0xf]
    %v2671 = vld [vmem:[%s3 + $0x4] sm:$0xf]
    %v2672 = vld [vmem:[%s3 + $0x8] sm:$0xf]
    %v2673 = vld [vmem:[%s3 + $0xc] sm:$0xf]
    %v2674 = vld [vmem:[%s3 + $0x10] sm:$0xf]
    %v2675 = vld [vmem:[%s3 + $0x14] sm:$0xf]
    %v2676 = vld [vmem:[%s3 + $0x18] sm:$0xf]
    %v2677 = vld [vmem:[%s3 + $0x1c] sm:$0xf]
    %v2678 = vld [vmem:[%s3 + $0x20] sm:$0xf]
    %v2679 = vld [vmem:[%s3 + $0x24] sm:$0xf]
    %v2680 = vld [vmem:[%s3 + $0x28] sm:$0xf]
    %v2681 = vld [vmem:[%s3 + $0x2c] sm:$0xf]
    %v2682 = vld [vmem:[%s3 + $0x30] sm:$0xf]
    %v2683 = vld [vmem:[%s3 + $0x34] sm:$0xf]
    %v2684 = vld [vmem:[%s3 + $0x38] sm:$0xf]
    %v2685 = vld [vmem:[%s3 + $0x3c] sm:$0xf]
    %v2686 = vld [vmem:[%s3 + $0x40] sm:$0xf]
    %v2687 = vld [vmem:[%s3 + $0x44] sm:$0xf]
    %v2688 = vld [vmem:[%s3 + $0x48] sm:$0xf]
    %v2689 = vld [vmem:[%s3 + $0x4c] sm:$0xf]
    %v2690 = vld [vmem:[%s3 + $0x50] sm:$0xf]
    %v2691 = vld [vmem:[%s3 + $0x54] sm:$0xf]
    %v2692 = vld [vmem:[%s3 + $0x58] sm:$0xf]
    %v2693 = vld [vmem:[%s3 + $0x5c] sm:$0xf]
    %v2694 = vld [vmem:[%s3 + $0x60] sm:$0xf]
    %v2695 = vld [vmem:[%s3 + $0x64] sm:$0xf]
    %v2696 = vld [vmem:[%s3 + $0x68] sm:$0xf]
    %v2697 = vld [vmem:[%s3 + $0x6c] sm:$0xf]
    %v2698 = vld [vmem:[%s3 + $0x70] sm:$0xf]
    %v2699 = vld [vmem:[%s3 + $0x74] sm:$0xf]
    %v2700 = vld [vmem:[%s3 + $0x78] sm:$0xf]
    %v2701 = vld [vmem:[%s3 + $0x7c] sm:$0xf]
    %v2702 = vld [vmem:[%s3 + $0x80] sm:$0xf]
    %v2703 = vld [vmem:[%s3 + $0x84] sm:$0xf]
    %v2704 = vld [vmem:[%s3 + $0x88] sm:$0xf]
    %v2705 = vld [vmem:[%s3 + $0x8c] sm:$0xf]
    %v2706 = vld [vmem:[%s3 + $0x90] sm:$0xf]
    %v2707 = vld [vmem:[%s3 + $0x94] sm:$0xf]
    %v2708 = vld [vmem:[%s3 + $0x98] sm:$0xf]
    %v2709 = vld [vmem:[%s3 + $0x9c] sm:$0xf]
    %v2710 = vld [vmem:[%s3 + $0xa0] sm:$0xf]
    %v2711 = vld [vmem:[%s3 + $0xa4] sm:$0xf]
    %v2712 = vld [vmem:[%s3 + $0xa8] sm:$0xf]
    %v2713 = vld [vmem:[%s3 + $0xac] sm:$0xf]
    %v2714 = vld [vmem:[%s3 + $0xb0] sm:$0xf]
    %v2715 = vld [vmem:[%s3 + $0xb4] sm:$0xf]
    %v2716 = vld [vmem:[%s3 + $0xb8] sm:$0xf]
    %v2717 = vld [vmem:[%s3 + $0xbc] sm:$0xf]
    %v2718 = vld [vmem:[%s3 + $0xc0] sm:$0xf]
    %v2719 = vld [vmem:[%s3 + $0xc4] sm:$0xf]
    %v2720 = vld [vmem:[%s3 + $0xc8] sm:$0xf]
    %v2721 = vld [vmem:[%s3 + $0xcc] sm:$0xf]
    %v2722 = vld [vmem:[%s3 + $0xd0] sm:$0xf]
    %v2723 = vld [vmem:[%s3 + $0xd4] sm:$0xf]
    %v2724 = vld [vmem:[%s3 + $0xd8] sm:$0xf]
    %v2725 = vld [vmem:[%s3 + $0xdc] sm:$0xf]
    %v2726 = vld [vmem:[%s3 + $0xe0] sm:$0xf]
    %v2727 = vld [vmem:[%s3 + $0xe4] sm:$0xf]
    %v2728 = vld [vmem:[%s3 + $0xe8] sm:$0xf]
    %v2729 = vld [vmem:[%s3 + $0xec] sm:$0xf]
    %v2730 = vld [vmem:[%s3 + $0xf0] sm:$0xf]
    %v2731 = vld [vmem:[%s3 + $0xf4] sm:$0xf]
    %v2732 = vld [vmem:[%s3 + $0xf8] sm:$0xf]
    %v2733 = vld [vmem:[%s3 + $0xfc] sm:$0xf]
    %v2734 = vld [vmem:[%s3 + $0x100] sm:$0xf]
    %v2735 = vld [vmem:[%s3 + $0x104] sm:$0xf]
    %v2736 = vld [vmem:[%s3 + $0x108] sm:$0xf]
    %v2737 = vld [vmem:[%s3 + $0x10c] sm:$0xf]
    %v2738 = vld [vmem:[%s3 + $0x110] sm:$0xf]
    %v2739 = vld [vmem:[%s3 + $0x114] sm:$0xf]
    %v2740 = vld [vmem:[%s3 + $0x118] sm:$0xf]
    %v2741 = vld [vmem:[%s3 + $0x11c] sm:$0xf]
    %v2742 = vld [vmem:[%s3 + $0x120] sm:$0xf]
    %v2743 = vld [vmem:[%s3 + $0x124] sm:$0xf]
    %v2744 = vld [vmem:[%s3 + $0x128] sm:$0xf]
    %v2745 = vld [vmem:[%s3 + $0x12c] sm:$0xf]
    %v2746 = vld [vmem:[%s3 + $0x130] sm:$0xf]
    %v2747 = vld [vmem:[%s3 + $0x134] sm:$0xf]
    %v2748 = vld [vmem:[%s3 + $0x138] sm:$0xf]
    %v2749 = vld [vmem:[%s3 + $0x13c] sm:$0xf]
    %v2750 = vld [vmem:[%s3 + $0x140] sm:$0xf]
    %v2751 = vld [vmem:[%s3 + $0x144] sm:$0xf]
    %v2752 = vld [vmem:[%s3 + $0x148] sm:$0xf]
    %v2753 = vld [vmem:[%s3 + $0x14c] sm:$0xf]
    %v2754 = vld [vmem:[%s3 + $0x150] sm:$0xf]
    %v2755 = vld [vmem:[%s3 + $0x154] sm:$0xf]
    %v2756 = vld [vmem:[%s3 + $0x158] sm:$0xf]
    %v2757 = vld [vmem:[%s3 + $0x15c] sm:$0xf]
    %v2758 = vld [vmem:[%s3 + $0x160] sm:$0xf]
    %v2759 = vld [vmem:[%s3 + $0x164] sm:$0xf]
    %v2760 = vld [vmem:[%s3 + $0x168] sm:$0xf]
    %v2761 = vld [vmem:[%s3 + $0x16c] sm:$0xf]
    %v2762 = vld [vmem:[%s3 + $0x170] sm:$0xf]
    %v2763 = vld [vmem:[%s3 + $0x174] sm:$0xf]
    %v2764 = vld [vmem:[%s3 + $0x178] sm:$0xf]
    %v2765 = vld [vmem:[%s3 + $0x17c] sm:$0xf]
    %v2766 = vld [vmem:[%s3 + $0x180] sm:$0xf]
    %v2767 = vld [vmem:[%s3 + $0x184] sm:$0xf]
    %v2768 = vld [vmem:[%s3 + $0x188] sm:$0xf]
    %v2769 = vld [vmem:[%s3 + $0x18c] sm:$0xf]
    %v2770 = vld [vmem:[%s3 + $0x190] sm:$0xf]
    %v2771 = vld [vmem:[%s3 + $0x194] sm:$0xf]
    %v2772 = vld [vmem:[%s3 + $0x198] sm:$0xf]
    %v2773 = vld [vmem:[%s3 + $0x19c] sm:$0xf]
    %v2774 = vld [vmem:[%s3 + $0x1a0] sm:$0xf]
    %v2775 = vld [vmem:[%s3 + $0x1a4] sm:$0xf]
    %v2776 = vld [vmem:[%s3 + $0x1a8] sm:$0xf]
    %v2777 = vld [vmem:[%s3 + $0x1ac] sm:$0xf]
    %v2778 = vld [vmem:[%s3 + $0x1b0] sm:$0xf]
    %v2779 = vld [vmem:[%s3 + $0x1b4] sm:$0xf]
    %v2780 = vld [vmem:[%s3 + $0x1b8] sm:$0xf]
    %v2781 = vld [vmem:[%s3 + $0x1bc] sm:$0xf]
    %v2782 = vld [vmem:[%s3 + $0x1c0] sm:$0xf]
    %v2783 = vld [vmem:[%s3 + $0x1c4] sm:$0xf]
    %v2784 = vld [vmem:[%s3 + $0x1c8] sm:$0xf]
    %v2785 = vld [vmem:[%s3 + $0x1cc] sm:$0xf]
    %v2786 = vld [vmem:[%s3 + $0x1d0] sm:$0xf]
    %v2787 = vld [vmem:[%s3 + $0x1d4] sm:$0xf]
    %v2788 = vld [vmem:[%s3 + $0x1d8] sm:$0xf]
    %v2789 = vld [vmem:[%s3 + $0x1dc] sm:$0xf]
    %v2790 = vld [vmem:[%s3 + $0x1e0] sm:$0xf]
    %v2791 = vld [vmem:[%s3 + $0x1e4] sm:$0xf]
    %v2792 = vld [vmem:[%s3 + $0x1e8] sm:$0xf]
    %v2793 = vld [vmem:[%s3 + $0x1ec] sm:$0xf]
    %v2794 = vld [vmem:[%s3 + $0x1f0] sm:$0xf]
    %v2795 = vld [vmem:[%s3 + $0x1f4] sm:$0xf]
    %v2796 = vld [vmem:[%s3 + $0x1f8] sm:$0xf]
    %v2797 = vld [vmem:[%s3 + $0x1fc] sm:$0xf]
    %v2798 = vld [vmem:[%s4] sm:$0x1]
    %v2800 = vperm.slane %v2798, 0
    %v2930 = vunpack.c.l.b16 %v2542
    %v2931 = vunpack.c.l.b16 %v2543
    %v2932 = vunpack.c.l.b16 %v2544
    %v2933 = vunpack.c.l.b16 %v2545
    %v2934 = vunpack.c.l.b16 %v2546
    %v2935 = vunpack.c.l.b16 %v2547
    %v2936 = vunpack.c.l.b16 %v2548
    %v2937 = vunpack.c.l.b16 %v2549
    %v2938 = vunpack.c.l.b16 %v2550
    %v2939 = vunpack.c.l.b16 %v2551
    %v2940 = vunpack.c.l.b16 %v2552
    %v2941 = vunpack.c.l.b16 %v2553
    %v2942 = vunpack.c.l.b16 %v2554
    %v2943 = vunpack.c.l.b16 %v2555
    %v2944 = vunpack.c.l.b16 %v2556
    %v2945 = vunpack.c.l.b16 %v2557
    %v2946 = vunpack.c.l.b16 %v2558
    %v2947 = vunpack.c.l.b16 %v2559
    %v2948 = vunpack.c.l.b16 %v2560
    %v2949 = vunpack.c.l.b16 %v2561
    %v2950 = vunpack.c.l.b16 %v2562
    %v2951 = vunpack.c.l.b16 %v2563
    %v2952 = vunpack.c.l.b16 %v2564
    %v2953 = vunpack.c.l.b16 %v2565
    %v2954 = vunpack.c.l.b16 %v2566
    %v2955 = vunpack.c.l.b16 %v2567
    %v2956 = vunpack.c.l.b16 %v2568
    %v2957 = vunpack.c.l.b16 %v2569
    %v2958 = vunpack.c.l.b16 %v2570
    %v2959 = vunpack.c.l.b16 %v2571
    %v2960 = vunpack.c.l.b16 %v2572
    %v2961 = vunpack.c.l.b16 %v2573
    %v2962 = vunpack.c.l.b16 %v2574
    %v2963 = vunpack.c.l.b16 %v2575
    %v2964 = vunpack.c.l.b16 %v2576
    %v2965 = vunpack.c.l.b16 %v2577
    %v2966 = vunpack.c.l.b16 %v2578
    %v2967 = vunpack.c.l.b16 %v2579
    %v2968 = vunpack.c.l.b16 %v2580
    %v2969 = vunpack.c.l.b16 %v2581
    %v2970 = vunpack.c.l.b16 %v2582
    %v2971 = vunpack.c.l.b16 %v2583
    %v2972 = vunpack.c.l.b16 %v2584
    %v2973 = vunpack.c.l.b16 %v2585
    %v2974 = vunpack.c.l.b16 %v2586
    %v2975 = vunpack.c.l.b16 %v2587
    %v2976 = vunpack.c.l.b16 %v2588
    %v2977 = vunpack.c.l.b16 %v2589
    %v2978 = vunpack.c.l.b16 %v2590
    %v2979 = vunpack.c.l.b16 %v2591
    %v2980 = vunpack.c.l.b16 %v2592
    %v2981 = vunpack.c.l.b16 %v2593
    %v2982 = vunpack.c.l.b16 %v2594
    %v2983 = vunpack.c.l.b16 %v2595
    %v2984 = vunpack.c.l.b16 %v2596
    %v2985 = vunpack.c.l.b16 %v2597
    %v2986 = vunpack.c.l.b16 %v2598
    %v2987 = vunpack.c.l.b16 %v2599
    %v2988 = vunpack.c.l.b16 %v2600
    %v2989 = vunpack.c.l.b16 %v2601
    %v2990 = vunpack.c.l.b16 %v2602
    %v2991 = vunpack.c.l.b16 %v2603
    %v2992 = vunpack.c.l.b16 %v2604
    %v2993 = vunpack.c.l.b16 %v2605
    %v2994 = vunpack.c.l.b16 %v2606
    %v2995 = vunpack.c.l.b16 %v2607
    %v2996 = vunpack.c.l.b16 %v2608
    %v2997 = vunpack.c.l.b16 %v2609
    %v2998 = vunpack.c.l.b16 %v2610
    %v2999 = vunpack.c.l.b16 %v2611
    %v3000 = vunpack.c.l.b16 %v2612
    %v3001 = vunpack.c.l.b16 %v2613
    %v3002 = vunpack.c.l.b16 %v2614
    %v3003 = vunpack.c.l.b16 %v2615
    %v3004 = vunpack.c.l.b16 %v2616
    %v3005 = vunpack.c.l.b16 %v2617
    %v3006 = vunpack.c.l.b16 %v2618
    %v3007 = vunpack.c.l.b16 %v2619
    %v3008 = vunpack.c.l.b16 %v2620
    %v3009 = vunpack.c.l.b16 %v2621
    %v3010 = vunpack.c.l.b16 %v2622
    %v3011 = vunpack.c.l.b16 %v2623
    %v3012 = vunpack.c.l.b16 %v2624
    %v3013 = vunpack.c.l.b16 %v2625
    %v3014 = vunpack.c.l.b16 %v2626
    %v3015 = vunpack.c.l.b16 %v2627
    %v3016 = vunpack.c.l.b16 %v2628
    %v3017 = vunpack.c.l.b16 %v2629
    %v3018 = vunpack.c.l.b16 %v2630
    %v3019 = vunpack.c.l.b16 %v2631
    %v3020 = vunpack.c.l.b16 %v2632
    %v3021 = vunpack.c.l.b16 %v2633
    %v3022 = vunpack.c.l.b16 %v2634
    %v3023 = vunpack.c.l.b16 %v2635
    %v3024 = vunpack.c.l.b16 %v2636
    %v3025 = vunpack.c.l.b16 %v2637
    %v3026 = vunpack.c.l.b16 %v2638
    %v3027 = vunpack.c.l.b16 %v2639
    %v3028 = vunpack.c.l.b16 %v2640
    %v3029 = vunpack.c.l.b16 %v2641
    %v3030 = vunpack.c.l.b16 %v2642
    %v3031 = vunpack.c.l.b16 %v2643
    %v3032 = vunpack.c.l.b16 %v2644
    %v3033 = vunpack.c.l.b16 %v2645
    %v3034 = vunpack.c.l.b16 %v2646
    %v3035 = vunpack.c.l.b16 %v2647
    %v3036 = vunpack.c.l.b16 %v2648
    %v3037 = vunpack.c.l.b16 %v2649
    %v3038 = vunpack.c.l.b16 %v2650
    %v3039 = vunpack.c.l.b16 %v2651
    %v3040 = vunpack.c.l.b16 %v2652
    %v3041 = vunpack.c.l.b16 %v2653
    %v3042 = vunpack.c.l.b16 %v2654
    %v3043 = vunpack.c.l.b16 %v2655
    %v3044 = vunpack.c.l.b16 %v2656
    %v3045 = vunpack.c.l.b16 %v2657
    %v3046 = vunpack.c.l.b16 %v2658
    %v3047 = vunpack.c.l.b16 %v2659
    %v3048 = vunpack.c.l.b16 %v2660
    %v3049 = vunpack.c.l.b16 %v2661
    %v3050 = vunpack.c.l.b16 %v2662
    %v3051 = vunpack.c.l.b16 %v2663
    %v3052 = vunpack.c.l.b16 %v2664
    %v3053 = vunpack.c.l.b16 %v2665
    %v3054 = vunpack.c.l.b16 %v2666
    %v3055 = vunpack.c.l.b16 %v2667
    %v3056 = vunpack.c.l.b16 %v2668
    %v3057 = vunpack.c.l.b16 %v2669
    %v3058 = vpack.c.b16 %v2931, %v2930
    %v3059 = vpack.c.b16 %v2933, %v2932
    %v3060 = vpack.c.b16 %v2935, %v2934
    %v3061 = vpack.c.b16 %v2937, %v2936
    %v3062 = vpack.c.b16 %v2939, %v2938
    %v3063 = vpack.c.b16 %v2941, %v2940
    %v3064 = vpack.c.b16 %v2943, %v2942
    %v3065 = vpack.c.b16 %v2945, %v2944
    %v3066 = vpack.c.b16 %v2947, %v2946
    %v3067 = vpack.c.b16 %v2949, %v2948
    %v3068 = vpack.c.b16 %v2951, %v2950
    %v3069 = vpack.c.b16 %v2953, %v2952
    %v3070 = vpack.c.b16 %v2955, %v2954
    %v3071 = vpack.c.b16 %v2957, %v2956
    %v3072 = vpack.c.b16 %v2959, %v2958
    %v3073 = vpack.c.b16 %v2961, %v2960
    %v3074 = vpack.c.b16 %v2963, %v2962
    %v3075 = vpack.c.b16 %v2965, %v2964
    %v3076 = vpack.c.b16 %v2967, %v2966
    %v3077 = vpack.c.b16 %v2969, %v2968
    %v3078 = vpack.c.b16 %v2971, %v2970
    %v3079 = vpack.c.b16 %v2973, %v2972
    %v3080 = vpack.c.b16 %v2975, %v2974
    %v3081 = vpack.c.b16 %v2977, %v2976
    %v3082 = vpack.c.b16 %v2979, %v2978
    %v3083 = vpack.c.b16 %v2981, %v2980
    %v3084 = vpack.c.b16 %v2983, %v2982
    %v3085 = vpack.c.b16 %v2985, %v2984
    %v3086 = vpack.c.b16 %v2987, %v2986
    %v3087 = vpack.c.b16 %v2989, %v2988
    %v3088 = vpack.c.b16 %v2991, %v2990
    %v3089 = vpack.c.b16 %v2993, %v2992
    %v3090 = vpack.c.b16 %v2995, %v2994
    %v3091 = vpack.c.b16 %v2997, %v2996
    %v3092 = vpack.c.b16 %v2999, %v2998
    %v3093 = vpack.c.b16 %v3001, %v3000
    %v3094 = vpack.c.b16 %v3003, %v3002
    %v3095 = vpack.c.b16 %v3005, %v3004
    %v3096 = vpack.c.b16 %v3007, %v3006
    %v3097 = vpack.c.b16 %v3009, %v3008
    %v3098 = vpack.c.b16 %v3011, %v3010
    %v3099 = vpack.c.b16 %v3013, %v3012
    %v3100 = vpack.c.b16 %v3015, %v3014
    %v3101 = vpack.c.b16 %v3017, %v3016
    %v3102 = vpack.c.b16 %v3019, %v3018
    %v3103 = vpack.c.b16 %v3021, %v3020
    %v3104 = vpack.c.b16 %v3023, %v3022
    %v3105 = vpack.c.b16 %v3025, %v3024
    %v3106 = vpack.c.b16 %v3027, %v3026
    %v3107 = vpack.c.b16 %v3029, %v3028
    %v3108 = vpack.c.b16 %v3031, %v3030
    %v3109 = vpack.c.b16 %v3033, %v3032
    %v3110 = vpack.c.b16 %v3035, %v3034
    %v3111 = vpack.c.b16 %v3037, %v3036
    %v3112 = vpack.c.b16 %v3039, %v3038
    %v3113 = vpack.c.b16 %v3041, %v3040
    %v3114 = vpack.c.b16 %v3043, %v3042
    %v3115 = vpack.c.b16 %v3045, %v3044
    %v3116 = vpack.c.b16 %v3047, %v3046
    %v3117 = vpack.c.b16 %v3049, %v3048
    %v3118 = vpack.c.b16 %v3051, %v3050
    %v3119 = vpack.c.b16 %v3053, %v3052
    %v3120 = vpack.c.b16 %v3055, %v3054
    %v3121 = vpack.c.b16 %v3057, %v3056
    %3186 = vxpose.xlu0.c.b16.start [1/8] %v3058, 128
    %3187 = vxpose.xlu0.c.b16.cont [2/8] %v3059, 128
    %3188 = vxpose.xlu0.c.b16.cont [3/8] %v3060, 128
    %3189 = vxpose.xlu0.c.b16.cont [4/8] %v3061, 128
    %3190 = vxpose.xlu0.c.b16.cont [5/8] %v3062, 128
    %3191 = vxpose.xlu0.c.b16.cont [6/8] %v3063, 128
    %3192 = vxpose.xlu0.c.b16.cont [7/8] %v3064, 128
    %3193 = vxpose.xlu0.c.b16.end [8/8] %v3065, 128
    %v3194 = vpop.trf.xlu0
    %v3195 = vpop.trf.xlu0
    %v3196 = vpop.trf.xlu0
    %v3197 = vpop.trf.xlu0
    %v3198 = vpop.trf.xlu0
    %v3199 = vpop.trf.xlu0
    %v3200 = vpop.trf.xlu0
    %v3201 = vpop.trf.xlu0
    %3202 = vxpose.xlu0.c.b16.start [1/8] %v3066, 128
    %3203 = vxpose.xlu0.c.b16.cont [2/8] %v3067, 128
    %3204 = vxpose.xlu0.c.b16.cont [3/8] %v3068, 128
    %3205 = vxpose.xlu0.c.b16.cont [4/8] %v3069, 128
    %3206 = vxpose.xlu0.c.b16.cont [5/8] %v3070, 128
    %3207 = vxpose.xlu0.c.b16.cont [6/8] %v3071, 128
    %3208 = vxpose.xlu0.c.b16.cont [7/8] %v3072, 128
    %3209 = vxpose.xlu0.c.b16.end [8/8] %v3073, 128
    %v3210 = vpop.trf.xlu0
    %v3211 = vpop.trf.xlu0
    %v3212 = vpop.trf.xlu0
    %v3213 = vpop.trf.xlu0
    %v3214 = vpop.trf.xlu0
    %v3215 = vpop.trf.xlu0
    %v3216 = vpop.trf.xlu0
    %v3217 = vpop.trf.xlu0
    %3218 = vxpose.xlu0.c.b16.start [1/8] %v3074, 128
    %3219 = vxpose.xlu0.c.b16.cont [2/8] %v3075, 128
    %3220 = vxpose.xlu0.c.b16.cont [3/8] %v3076, 128
    %3221 = vxpose.xlu0.c.b16.cont [4/8] %v3077, 128
    %3222 = vxpose.xlu0.c.b16.cont [5/8] %v3078, 128
    %3223 = vxpose.xlu0.c.b16.cont [6/8] %v3079, 128
    %3224 = vxpose.xlu0.c.b16.cont [7/8] %v3080, 128
    %3225 = vxpose.xlu0.c.b16.end [8/8] %v3081, 128
    %v3226 = vpop.trf.xlu0
    %v3227 = vpop.trf.xlu0
    %v3228 = vpop.trf.xlu0
    %v3229 = vpop.trf.xlu0
    %v3230 = vpop.trf.xlu0
    %v3231 = vpop.trf.xlu0
    %v3232 = vpop.trf.xlu0
    %v3233 = vpop.trf.xlu0
    %3234 = vxpose.xlu0.c.b16.start [1/8] %v3082, 128
    %3235 = vxpose.xlu0.c.b16.cont [2/8] %v3083, 128
    %3236 = vxpose.xlu0.c.b16.cont [3/8] %v3084, 128
    %3237 = vxpose.xlu0.c.b16.cont [4/8] %v3085, 128
    %3238 = vxpose.xlu0.c.b16.cont [5/8] %v3086, 128
    %3239 = vxpose.xlu0.c.b16.cont [6/8] %v3087, 128
    %3240 = vxpose.xlu0.c.b16.cont [7/8] %v3088, 128
    %3241 = vxpose.xlu0.c.b16.end [8/8] %v3089, 128
    %v3242 = vpop.trf.xlu0
    %v3243 = vpop.trf.xlu0
    %v3244 = vpop.trf.xlu0
    %v3245 = vpop.trf.xlu0
    %v3246 = vpop.trf.xlu0
    %v3247 = vpop.trf.xlu0
    %v3248 = vpop.trf.xlu0
    %v3249 = vpop.trf.xlu0
    %3250 = vxpose.xlu0.c.b16.start [1/8] %v3090, 128
    %3251 = vxpose.xlu0.c.b16.cont [2/8] %v3091, 128
    %3252 = vxpose.xlu0.c.b16.cont [3/8] %v3092, 128
    %3253 = vxpose.xlu0.c.b16.cont [4/8] %v3093, 128
    %3254 = vxpose.xlu0.c.b16.cont [5/8] %v3094, 128
    %3255 = vxpose.xlu0.c.b16.cont [6/8] %v3095, 128
    %3256 = vxpose.xlu0.c.b16.cont [7/8] %v3096, 128
    %3257 = vxpose.xlu0.c.b16.end [8/8] %v3097, 128
    %v3258 = vpop.trf.xlu0
    %v3259 = vpop.trf.xlu0
    %v3260 = vpop.trf.xlu0
    %v3261 = vpop.trf.xlu0
    %v3262 = vpop.trf.xlu0
    %v3263 = vpop.trf.xlu0
    %v3264 = vpop.trf.xlu0
    %v3265 = vpop.trf.xlu0
    %3266 = vxpose.xlu0.c.b16.start [1/8] %v3098, 128
    %3267 = vxpose.xlu0.c.b16.cont [2/8] %v3099, 128
    %3268 = vxpose.xlu0.c.b16.cont [3/8] %v3100, 128
    %3269 = vxpose.xlu0.c.b16.cont [4/8] %v3101, 128
    %3270 = vxpose.xlu0.c.b16.cont [5/8] %v3102, 128
    %3271 = vxpose.xlu0.c.b16.cont [6/8] %v3103, 128
    %3272 = vxpose.xlu0.c.b16.cont [7/8] %v3104, 128
    %3273 = vxpose.xlu0.c.b16.end [8/8] %v3105, 128
    %v3274 = vpop.trf.xlu0
    %v3275 = vpop.trf.xlu0
    %v3276 = vpop.trf.xlu0
    %v3277 = vpop.trf.xlu0
    %v3278 = vpop.trf.xlu0
    %v3279 = vpop.trf.xlu0
    %v3280 = vpop.trf.xlu0
    %v3281 = vpop.trf.xlu0
    %3282 = vxpose.xlu0.c.b16.start [1/8] %v3106, 128
    %3283 = vxpose.xlu0.c.b16.cont [2/8] %v3107, 128
    %3284 = vxpose.xlu0.c.b16.cont [3/8] %v3108, 128
    %3285 = vxpose.xlu0.c.b16.cont [4/8] %v3109, 128
    %3286 = vxpose.xlu0.c.b16.cont [5/8] %v3110, 128
    %3287 = vxpose.xlu0.c.b16.cont [6/8] %v3111, 128
    %3288 = vxpose.xlu0.c.b16.cont [7/8] %v3112, 128
    %3289 = vxpose.xlu0.c.b16.end [8/8] %v3113, 128
    %v3290 = vpop.trf.xlu0
    %v3291 = vpop.trf.xlu0
    %v3292 = vpop.trf.xlu0
    %v3293 = vpop.trf.xlu0
    %v3294 = vpop.trf.xlu0
    %v3295 = vpop.trf.xlu0
    %v3296 = vpop.trf.xlu0
    %v3297 = vpop.trf.xlu0
    %3298 = vxpose.xlu0.c.b16.start [1/8] %v3114, 128
    %3299 = vxpose.xlu0.c.b16.cont [2/8] %v3115, 128
    %3300 = vxpose.xlu0.c.b16.cont [3/8] %v3116, 128
    %3301 = vxpose.xlu0.c.b16.cont [4/8] %v3117, 128
    %3302 = vxpose.xlu0.c.b16.cont [5/8] %v3118, 128
    %3303 = vxpose.xlu0.c.b16.cont [6/8] %v3119, 128
    %3304 = vxpose.xlu0.c.b16.cont [7/8] %v3120, 128
    %3305 = vxpose.xlu0.c.b16.end [8/8] %v3121, 128
    %v3306 = vpop.trf.xlu0
    %v3307 = vpop.trf.xlu0
    %v3308 = vpop.trf.xlu0
    %v3309 = vpop.trf.xlu0
    %v3310 = vpop.trf.xlu0
    %v3311 = vpop.trf.xlu0
    %v3312 = vpop.trf.xlu0
    %v3313 = vpop.trf.xlu0
    %v3442 = vunpack.c.l.b16 %v2670
    %v3443 = vunpack.c.l.b16 %v2671
    %v3444 = vunpack.c.l.b16 %v2672
    %v3445 = vunpack.c.l.b16 %v2673
    %v3446 = vunpack.c.l.b16 %v2674
    %v3447 = vunpack.c.l.b16 %v2675
    %v3448 = vunpack.c.l.b16 %v2676
    %v3449 = vunpack.c.l.b16 %v2677
    %v3450 = vunpack.c.l.b16 %v2678
    %v3451 = vunpack.c.l.b16 %v2679
    %v3452 = vunpack.c.l.b16 %v2680
    %v3453 = vunpack.c.l.b16 %v2681
    %v3454 = vunpack.c.l.b16 %v2682
    %v3455 = vunpack.c.l.b16 %v2683
    %v3456 = vunpack.c.l.b16 %v2684
    %v3457 = vunpack.c.l.b16 %v2685
    %v3458 = vunpack.c.l.b16 %v2686
    %v3459 = vunpack.c.l.b16 %v2687
    %v3460 = vunpack.c.l.b16 %v2688
    %v3461 = vunpack.c.l.b16 %v2689
    %v3462 = vunpack.c.l.b16 %v2690
    %v3463 = vunpack.c.l.b16 %v2691
    %v3464 = vunpack.c.l.b16 %v2692
    %v3465 = vunpack.c.l.b16 %v2693
    %v3466 = vunpack.c.l.b16 %v2694
    %v3467 = vunpack.c.l.b16 %v2695
    %v3468 = vunpack.c.l.b16 %v2696
    %v3469 = vunpack.c.l.b16 %v2697
    %v3470 = vunpack.c.l.b16 %v2698
    %v3471 = vunpack.c.l.b16 %v2699
    %v3472 = vunpack.c.l.b16 %v2700
    %v3473 = vunpack.c.l.b16 %v2701
    %v3474 = vunpack.c.l.b16 %v2702
    %v3475 = vunpack.c.l.b16 %v2703
    %v3476 = vunpack.c.l.b16 %v2704
    %v3477 = vunpack.c.l.b16 %v2705
    %v3478 = vunpack.c.l.b16 %v2706
    %v3479 = vunpack.c.l.b16 %v2707
    %v3480 = vunpack.c.l.b16 %v2708
    %v3481 = vunpack.c.l.b16 %v2709
    %v3482 = vunpack.c.l.b16 %v2710
    %v3483 = vunpack.c.l.b16 %v2711
    %v3484 = vunpack.c.l.b16 %v2712
    %v3485 = vunpack.c.l.b16 %v2713
    %v3486 = vunpack.c.l.b16 %v2714
    %v3487 = vunpack.c.l.b16 %v2715
    %v3488 = vunpack.c.l.b16 %v2716
    %v3489 = vunpack.c.l.b16 %v2717
    %v3490 = vunpack.c.l.b16 %v2718
    %v3491 = vunpack.c.l.b16 %v2719
    %v3492 = vunpack.c.l.b16 %v2720
    %v3493 = vunpack.c.l.b16 %v2721
    %v3494 = vunpack.c.l.b16 %v2722
    %v3495 = vunpack.c.l.b16 %v2723
    %v3496 = vunpack.c.l.b16 %v2724
    %v3497 = vunpack.c.l.b16 %v2725
    %v3498 = vunpack.c.l.b16 %v2726
    %v3499 = vunpack.c.l.b16 %v2727
    %v3500 = vunpack.c.l.b16 %v2728
    %v3501 = vunpack.c.l.b16 %v2729
    %v3502 = vunpack.c.l.b16 %v2730
    %v3503 = vunpack.c.l.b16 %v2731
    %v3504 = vunpack.c.l.b16 %v2732
    %v3505 = vunpack.c.l.b16 %v2733
    %v3506 = vunpack.c.l.b16 %v2734
    %v3507 = vunpack.c.l.b16 %v2735
    %v3508 = vunpack.c.l.b16 %v2736
    %v3509 = vunpack.c.l.b16 %v2737
    %v3510 = vunpack.c.l.b16 %v2738
    %v3511 = vunpack.c.l.b16 %v2739
    %v3512 = vunpack.c.l.b16 %v2740
    %v3513 = vunpack.c.l.b16 %v2741
    %v3514 = vunpack.c.l.b16 %v2742
    %v3515 = vunpack.c.l.b16 %v2743
    %v3516 = vunpack.c.l.b16 %v2744
    %v3517 = vunpack.c.l.b16 %v2745
    %v3518 = vunpack.c.l.b16 %v2746
    %v3519 = vunpack.c.l.b16 %v2747
    %v3520 = vunpack.c.l.b16 %v2748
    %v3521 = vunpack.c.l.b16 %v2749
    %v3522 = vunpack.c.l.b16 %v2750
    %v3523 = vunpack.c.l.b16 %v2751
    %v3524 = vunpack.c.l.b16 %v2752
    %v3525 = vunpack.c.l.b16 %v2753
    %v3526 = vunpack.c.l.b16 %v2754
    %v3527 = vunpack.c.l.b16 %v2755
    %v3528 = vunpack.c.l.b16 %v2756
    %v3529 = vunpack.c.l.b16 %v2757
    %v3530 = vunpack.c.l.b16 %v2758
    %v3531 = vunpack.c.l.b16 %v2759
    %v3532 = vunpack.c.l.b16 %v2760
    %v3533 = vunpack.c.l.b16 %v2761
    %v3534 = vunpack.c.l.b16 %v2762
    %v3535 = vunpack.c.l.b16 %v2763
    %v3536 = vunpack.c.l.b16 %v2764
    %v3537 = vunpack.c.l.b16 %v2765
    %v3538 = vunpack.c.l.b16 %v2766
    %v3539 = vunpack.c.l.b16 %v2767
    %v3540 = vunpack.c.l.b16 %v2768
    %v3541 = vunpack.c.l.b16 %v2769
    %v3542 = vunpack.c.l.b16 %v2770
    %v3543 = vunpack.c.l.b16 %v2771
    %v3544 = vunpack.c.l.b16 %v2772
    %v3545 = vunpack.c.l.b16 %v2773
    %v3546 = vunpack.c.l.b16 %v2774
    %v3547 = vunpack.c.l.b16 %v2775
    %v3548 = vunpack.c.l.b16 %v2776
    %v3549 = vunpack.c.l.b16 %v2777
    %v3550 = vunpack.c.l.b16 %v2778
    %v3551 = vunpack.c.l.b16 %v2779
    %v3552 = vunpack.c.l.b16 %v2780
    %v3553 = vunpack.c.l.b16 %v2781
    %v3554 = vunpack.c.l.b16 %v2782
    %v3555 = vunpack.c.l.b16 %v2783
    %v3556 = vunpack.c.l.b16 %v2784
    %v3557 = vunpack.c.l.b16 %v2785
    %v3558 = vunpack.c.l.b16 %v2786
    %v3559 = vunpack.c.l.b16 %v2787
    %v3560 = vunpack.c.l.b16 %v2788
    %v3561 = vunpack.c.l.b16 %v2789
    %v3562 = vunpack.c.l.b16 %v2790
    %v3563 = vunpack.c.l.b16 %v2791
    %v3564 = vunpack.c.l.b16 %v2792
    %v3565 = vunpack.c.l.b16 %v2793
    %v3566 = vunpack.c.l.b16 %v2794
    %v3567 = vunpack.c.l.b16 %v2795
    %v3568 = vunpack.c.l.b16 %v2796
    %v3569 = vunpack.c.l.b16 %v2797
    %v3570 = vpack.c.b16 %v3443, %v3442
    %v3571 = vpack.c.b16 %v3445, %v3444
    %v3572 = vpack.c.b16 %v3447, %v3446
    %v3573 = vpack.c.b16 %v3449, %v3448
    %v3574 = vpack.c.b16 %v3451, %v3450
    %v3575 = vpack.c.b16 %v3453, %v3452
    %v3576 = vpack.c.b16 %v3455, %v3454
    %v3577 = vpack.c.b16 %v3457, %v3456
    %v3578 = vpack.c.b16 %v3459, %v3458
    %v3579 = vpack.c.b16 %v3461, %v3460
    %v3580 = vpack.c.b16 %v3463, %v3462
    %v3581 = vpack.c.b16 %v3465, %v3464
    %v3582 = vpack.c.b16 %v3467, %v3466
    %v3583 = vpack.c.b16 %v3469, %v3468
    %v3584 = vpack.c.b16 %v3471, %v3470
    %v3585 = vpack.c.b16 %v3473, %v3472
    %v3586 = vpack.c.b16 %v3475, %v3474
    %v3587 = vpack.c.b16 %v3477, %v3476
    %v3588 = vpack.c.b16 %v3479, %v3478
    %v3589 = vpack.c.b16 %v3481, %v3480
    %v3590 = vpack.c.b16 %v3483, %v3482
    %v3591 = vpack.c.b16 %v3485, %v3484
    %v3592 = vpack.c.b16 %v3487, %v3486
    %v3593 = vpack.c.b16 %v3489, %v3488
    %v3594 = vpack.c.b16 %v3491, %v3490
    %v3595 = vpack.c.b16 %v3493, %v3492
    %v3596 = vpack.c.b16 %v3495, %v3494
    %v3597 = vpack.c.b16 %v3497, %v3496
    %v3598 = vpack.c.b16 %v3499, %v3498
    %v3599 = vpack.c.b16 %v3501, %v3500
    %v3600 = vpack.c.b16 %v3503, %v3502
    %v3601 = vpack.c.b16 %v3505, %v3504
    %v3602 = vpack.c.b16 %v3507, %v3506
    %v3603 = vpack.c.b16 %v3509, %v3508
    %v3604 = vpack.c.b16 %v3511, %v3510
    %v3605 = vpack.c.b16 %v3513, %v3512
    %v3606 = vpack.c.b16 %v3515, %v3514
    %v3607 = vpack.c.b16 %v3517, %v3516
    %v3608 = vpack.c.b16 %v3519, %v3518
    %v3609 = vpack.c.b16 %v3521, %v3520
    %v3610 = vpack.c.b16 %v3523, %v3522
    %v3611 = vpack.c.b16 %v3525, %v3524
    %v3612 = vpack.c.b16 %v3527, %v3526
    %v3613 = vpack.c.b16 %v3529, %v3528
    %v3614 = vpack.c.b16 %v3531, %v3530
    %v3615 = vpack.c.b16 %v3533, %v3532
    %v3616 = vpack.c.b16 %v3535, %v3534
    %v3617 = vpack.c.b16 %v3537, %v3536
    %v3618 = vpack.c.b16 %v3539, %v3538
    %v3619 = vpack.c.b16 %v3541, %v3540
    %v3620 = vpack.c.b16 %v3543, %v3542
    %v3621 = vpack.c.b16 %v3545, %v3544
    %v3622 = vpack.c.b16 %v3547, %v3546
    %v3623 = vpack.c.b16 %v3549, %v3548
    %v3624 = vpack.c.b16 %v3551, %v3550
    %v3625 = vpack.c.b16 %v3553, %v3552
    %v3626 = vpack.c.b16 %v3555, %v3554
    %v3627 = vpack.c.b16 %v3557, %v3556
    %v3628 = vpack.c.b16 %v3559, %v3558
    %v3629 = vpack.c.b16 %v3561, %v3560
    %v3630 = vpack.c.b16 %v3563, %v3562
    %v3631 = vpack.c.b16 %v3565, %v3564
    %v3632 = vpack.c.b16 %v3567, %v3566
    %v3633 = vpack.c.b16 %v3569, %v3568
    %3698 = vmatpush.bf16.msra.mxu0 %v3577
    %3699 = vmatpush.bf16.msra.mxu0 %v3576
    %3700 = vmatpush.bf16.msra.mxu0 %v3575
    %3701 = vmatpush.bf16.msra.mxu0 %v3574
    %3702 = vmatpush.bf16.msra.mxu0 %v3573
    %3703 = vmatpush.bf16.msra.mxu0 %v3572
    %3704 = vmatpush.bf16.msra.mxu0 %v3571
    %3705 = vmatpush.bf16.msra.mxu0 %v3570
    %3706 = vmatmul.bf16.gmra.mxu0 %v3194
    %v3707 = vpop.f32.mrf.mxu0
    %v3708 = vadd.f32 %v2800, %v3707
    %v3709 = vpop.f32.mrf.mxu0
    %3710 = vdwg.mxu0
    %3711 = vmatpush.bf16.msra.mxu0 %v3585
    %3712 = vmatpush.bf16.msra.mxu0 %v3584
    %3713 = vmatpush.bf16.msra.mxu0 %v3583
    %3714 = vmatpush.bf16.msra.mxu0 %v3582
    %3715 = vmatpush.bf16.msra.mxu0 %v3581
    %3716 = vmatpush.bf16.msra.mxu0 %v3580
    %3717 = vmatpush.bf16.msra.mxu0 %v3579
    %3718 = vmatpush.bf16.msra.mxu0 %v3578
    %3719 = vmatmul.bf16.gmra.mxu0 %v3210
    %v3720 = vpop.f32.mrf.mxu0
    %v3721 = vadd.f32 %v3708, %v3720
    %v3722 = vpop.f32.mrf.mxu0
    %3723 = vdwg.mxu0
    %3724 = vmatpush.bf16.msra.mxu0 %v3593
    %3725 = vmatpush.bf16.msra.mxu0 %v3592
    %3726 = vmatpush.bf16.msra.mxu0 %v3591
    %3727 = vmatpush.bf16.msra.mxu0 %v3590
    %3728 = vmatpush.bf16.msra.mxu0 %v3589
    %3729 = vmatpush.bf16.msra.mxu0 %v3588
    %3730 = vmatpush.bf16.msra.mxu0 %v3587
    %3731 = vmatpush.bf16.msra.mxu0 %v3586
    %3732 = vmatmul.bf16.gmra.mxu0 %v3226
    %v3733 = vpop.f32.mrf.mxu0
    %v3734 = vadd.f32 %v3721, %v3733
    %v3735 = vpop.f32.mrf.mxu0
    %3736 = vdwg.mxu0
    %3737 = vmatpush.bf16.msra.mxu0 %v3601
    %3738 = vmatpush.bf16.msra.mxu0 %v3600
    %3739 = vmatpush.bf16.msra.mxu0 %v3599
    %3740 = vmatpush.bf16.msra.mxu0 %v3598
    %3741 = vmatpush.bf16.msra.mxu0 %v3597
    %3742 = vmatpush.bf16.msra.mxu0 %v3596
    %3743 = vmatpush.bf16.msra.mxu0 %v3595
    %3744 = vmatpush.bf16.msra.mxu0 %v3594
    %3745 = vmatmul.bf16.gmra.mxu0 %v3242
    %v3746 = vpop.f32.mrf.mxu0
    %v3747 = vadd.f32 %v3734, %v3746
    %v3748 = vpop.f32.mrf.mxu0
    %3749 = vdwg.mxu0
    %3750 = vmatpush.bf16.msra.mxu0 %v3609
    %3751 = vmatpush.bf16.msra.mxu0 %v3608
    %3752 = vmatpush.bf16.msra.mxu0 %v3607
    %3753 = vmatpush.bf16.msra.mxu0 %v3606
    %3754 = vmatpush.bf16.msra.mxu0 %v3605
    %3755 = vmatpush.bf16.msra.mxu0 %v3604
    %3756 = vmatpush.bf16.msra.mxu0 %v3603
    %3757 = vmatpush.bf16.msra.mxu0 %v3602
    %3758 = vmatmul.bf16.gmra.mxu0 %v3258
    %v3759 = vpop.f32.mrf.mxu0
    %v3760 = vadd.f32 %v3747, %v3759
    %v3761 = vpop.f32.mrf.mxu0
    %3762 = vdwg.mxu0
    %3763 = vmatpush.bf16.msra.mxu0 %v3617
    %3764 = vmatpush.bf16.msra.mxu0 %v3616
    %3765 = vmatpush.bf16.msra.mxu0 %v3615
    %3766 = vmatpush.bf16.msra.mxu0 %v3614
    %3767 = vmatpush.bf16.msra.mxu0 %v3613
    %3768 = vmatpush.bf16.msra.mxu0 %v3612
    %3769 = vmatpush.bf16.msra.mxu0 %v3611
    %3770 = vmatpush.bf16.msra.mxu0 %v3610
    %3771 = vmatmul.bf16.gmra.mxu0 %v3274
    %v3772 = vpop.f32.mrf.mxu0
    %v3773 = vadd.f32 %v3760, %v3772
    %v3774 = vpop.f32.mrf.mxu0
    %3775 = vdwg.mxu0
    %3776 = vmatpush.bf16.msra.mxu0 %v3625
    %3777 = vmatpush.bf16.msra.mxu0 %v3624
    %3778 = vmatpush.bf16.msra.mxu0 %v3623
    %3779 = vmatpush.bf16.msra.mxu0 %v3622
    %3780 = vmatpush.bf16.msra.mxu0 %v3621
    %3781 = vmatpush.bf16.msra.mxu0 %v3620
    %3782 = vmatpush.bf16.msra.mxu0 %v3619
    %3783 = vmatpush.bf16.msra.mxu0 %v3618
    %3784 = vmatmul.bf16.gmra.mxu0 %v3290
    %v3785 = vpop.f32.mrf.mxu0
    %v3786 = vadd.f32 %v3773, %v3785
    %v3787 = vpop.f32.mrf.mxu0
    %3788 = vdwg.mxu0
    %3789 = vmatpush.bf16.msra.mxu0 %v3633
    %3790 = vmatpush.bf16.msra.mxu0 %v3632
    %3791 = vmatpush.bf16.msra.mxu0 %v3631
    %3792 = vmatpush.bf16.msra.mxu0 %v3630
    %3793 = vmatpush.bf16.msra.mxu0 %v3629
    %3794 = vmatpush.bf16.msra.mxu0 %v3628
    %3795 = vmatpush.bf16.msra.mxu0 %v3627
    %3796 = vmatpush.bf16.msra.mxu0 %v3626
    %3797 = vmatmul.bf16.gmra.mxu0 %v3306
    %v3798 = vpop.f32.mrf.mxu0
    %v3799 = vadd.f32 %v3786, %v3798
    %v3800 = vpop.f32.mrf.mxu0
    %3801 = vdwg.mxu0
    %3802 = vst [vmem:[#allocation2] sm:$0x3] %v3799
    // Predicated region
    $region22: #{ae_encoder_forward.1} parent=1 // pred_check
      _
    $region23: #{ae_encoder_forward.1} parent=1 // pred_check_branch
      %3804 = sbr.rel (0) target = $region25
    $region24: #{ae_encoder_forward.1} parent=1 // pred_region
      %3806 = vsyncadd [#allocation3], 0
      %s3808 = sshll.u32 [#allocation2], 4
      %s3809 = int_to_ptr.vmem [resolvable:$true] %s3808
      %s3810 = sshll.u32 %s5, 4
      %s3811 = int_to_ptr.hbm [resolvable:$true] %s3810
      %3813 = dma.vmem_to_hbm [thread:$0]  %s3809, 32, %s3811, [#allocation3]
    $region25: #{ae_encoder_forward.1} parent=1 // pred_fallthru
      _
    // Predicated region
    $region26: #{ae_encoder_forward.1} parent=1 // pred_check
      _
    $region27: #{ae_encoder_forward.1} parent=1 // pred_check_branch
      %3815 = sbr.rel (0) target = $region29
    $region28: #{ae_encoder_forward.1} parent=1 // pred_region
      %3817 = dma.done [#allocation3], 32
    $region29: #{ae_encoder_forward.1} parent=1 // pred_fallthru
      _
    %3818 = vsyncpa [#allocation3], 1

</llo_original>
